<compile_context>
chip_gen: v6e
topology: v6e:2x2x1
jax: 0.10.0
libtpu: 0.0.40
codegen_flags: <defaults>
</compile_context>

<pallas_src>
import functools

import jax
import jax.numpy as jnp
from jax.experimental import pallas as pl
from jax.experimental.pallas import tpu as pltpu


# -----------------------------------------------------------------------------
# Fused kernel: entity-vector encoding + autoregressive per-digit LSTM decode.
# -----------------------------------------------------------------------------
def _hier_code_kernel(ent_ref, ent_mask_ref, ctx_ref, ctx_mask_ref,
                      w_ev_ent_ref, w_ev_ctx_ref, b_ev_ref,
                      w_xe_ref, w_rec_ref, b_lstm_ref,
                      w_out_ref, b_out_ref,
                      out_ref, *, n_digits, n_ary, n_hidden, out_pad):
    A = n_ary
    H = n_hidden

    # ---------- EntityVectorEncoder: masked mean pooling (VPU) + linear + tanh --------
    def masked_mean(x_ref, m_ref):
        x = x_ref[...].astype(jnp.float32)                           # (Bb, S, D)
        m = m_ref[...].astype(jnp.float32)                           # (Bb, S), 1 = valid
        cnt = jnp.maximum(jnp.sum(m, axis=-1, keepdims=True), 1.0)   # (Bb, 1)
        w = m / cnt                                                  # exact divide
        # VPU multiply + cross-sublane reduce; the block streams through VMEM anyway.
        return jnp.sum(x * w[:, :, None], axis=1)                    # (Bb, D) f32

    ent_avg = masked_mean(ent_ref, ent_mask_ref)
    ctx_avg = masked_mean(ctx_ref, ctx_mask_ref)

    # Linear over concat([ent_avg, ctx_avg]) expressed as two matmuls (no lane concat).
    pre = (jnp.dot(ent_avg.astype(jnp.bfloat16), w_ev_ent_ref[...],
                   preferred_element_type=jnp.float32)
           + jnp.dot(ctx_avg.astype(jnp.bfloat16), w_ev_ctx_ref[...],
                     preferred_element_type=jnp.float32)
           + b_ev_ref[...])
    ev = jnp.tanh(pre)                                               # (Bb, D) f32

    bb = ev.shape[0]

    # ---- Hoisted loop-invariant input contribution (once, not per gate/digit). -------
    xe_all = (jnp.dot(ev.astype(jnp.bfloat16), w_xe_ref[...],
                      preferred_element_type=jnp.float32)
              + b_lstm_ref[...])                                     # (Bb, 4H) f32

    # Hoist the output-bias broadcast out of the digit loop (no CSE of broadcasts).
    b_out = jnp.broadcast_to(b_out_ref[...], (bb, A))                # (Bb, A) f32

    h = jnp.zeros((bb, H), jnp.float32)
    c = jnp.zeros((bb, H), jnp.float32)
    prev = jnp.zeros((bb, A), jnp.float32)   # previous digit's code probability

    digits = []
    # n_digits is a small static constant -> full unroll, state lives in vregs.
    for _d in range(n_digits):
        # One fused recurrent matmul per digit: [prev | h] @ W_rec(A+H, 4H).
        xh = jnp.concatenate([prev, h], axis=-1).astype(jnp.bfloat16)   # (Bb, A+H)
        pre_act = xe_all + jnp.dot(xh, w_rec_ref[...],
                                   preferred_element_type=jnp.float32)  # (Bb, 4H)

        # Dense EUP: one sigmoid over the whole 4H vreg + one tanh on the g slice.
        # Gate order along 4H: [i | f | o | g].
        sig = jax.nn.sigmoid(pre_act)
        g_g = jnp.tanh(pre_act[:, 3 * H:4 * H])
        i_g = sig[:, 0:H]
        f_g = sig[:, H:2 * H]
        o_g = sig[:, 2 * H:3 * H]

        c = f_g * c + i_g * g_g
        h = o_g * jnp.tanh(c)

        logits = (jnp.dot(h.astype(jnp.bfloat16), w_out_ref[...],
                          preferred_element_type=jnp.float32)
                  + b_out)                                           # (Bb, A)
        m = jnp.max(logits, axis=-1, keepdims=True)
        e = jnp.exp(logits - m)
        probs = e / jnp.sum(e, axis=-1, keepdims=True)               # exact softmax

        digits.append(probs)
        prev = probs

    # Lane-dense store: pad the concatenated digits up to a multiple of 128 lanes.
    if out_pad > n_digits * A:
        digits.append(jnp.zeros((bb, out_pad - n_digits * A), jnp.float32))
    out_ref[...] = jnp.concatenate(digits, axis=-1)


# -----------------------------------------------------------------------------
# VMEM-aware batch blocking.
# -----------------------------------------------------------------------------
def _vmem_capacity_bytes():
    try:
        return int(pltpu.get_tpu_info().vmem_capacity_bytes)
    except Exception:
        return 64 * 1024 * 1024   # conservative fallback (v7x per-TC VMEM)


def _choose_block_b(B, per_row_bytes, fixed_bytes, vmem_cap):
    budget = max(vmem_cap // 2 - fixed_bytes, 8 * per_row_bytes)
    cap = max(8, budget // max(per_row_bytes, 1))
    cands = [b for b in range(8, B + 1, 8) if B % b == 0 and b <= cap]
    if not cands:
        return B                      # tiny / odd batch: single full block
    # Prefer >=2 grid steps so the "parallel" axis can shard across v7x's 2 TCs.
    multi = [b for b in cands if B // b >= 2]
    return max(multi) if multi else max(cands)


def hierarchical_code_forward(entity_embeddings, entity_sequence_mask,
                              context_embeddings, context_sequence_mask,
                              params, *, n_digits, n_ary, block_b=None):
    B, S_e, D = entity_embeddings.shape
    _, S_c, _ = context_embeddings.shape
    H = params["w_out"].shape[0]
    A = n_ary
    out_pad = ((n_digits * A + 127) // 128) * 128

    # --- VMEM accounting (bytes): double-buffered streamed blocks + resident weights.
    per_row_bytes = (2 * 2 * ((S_e + S_c) * D + S_e + S_c)   # bf16 embeddings + masks
                     + 2 * 4 * out_pad)                      # f32 output slab
    weight_bytes = (2 * (D * D * 2 + D * 4 * H + (A + H) * 4 * H + H * A)   # bf16
                    + 4 * (D + 4 * H + A))                                  # f32 biases
    fixed_bytes = 2 * weight_bytes   # conservative: assume pipeline double-buffers them
    vmem_cap = _vmem_capacity_bytes()

    if block_b is None:
        block_b = _choose_block_b(B, per_row_bytes, fixed_bytes, vmem_cap)
    assert B % block_b == 0, "batch must be divisible by the batch block"
    n_b_blocks = B // block_b

    est_bytes = fixed_bytes + block_b * per_row_bytes
    vmem_limit = int(min(vmem_cap, max(2 * est_bytes, 32 * 1024 * 1024)))

    # PyTorch masks: True = padding. Convert to bf16 "valid" masks; stream embeddings
    # as bf16 too (only consumers are bf16 matmuls / f32-accumulated mean).
    ent_bf = entity_embeddings.astype(jnp.bfloat16)
    ctx_bf = context_embeddings.astype(jnp.bfloat16)
    ent_valid = (~entity_sequence_mask).astype(jnp.bfloat16)
    ctx_valid = (~context_sequence_mask).astype(jnp.bfloat16)

    kernel = functools.partial(_hier_code_kernel, n_digits=n_digits, n_ary=n_ary,
                               n_hidden=H, out_pad=out_pad)

    grid_spec = pltpu.PrefetchScalarGridSpec(
        num_scalar_prefetch=0,
        grid=(n_b_blocks,),                                          # parallel over batch
        in_specs=[
            pl.BlockSpec((block_b, S_e, D), lambda b: (b, 0, 0)),    # entity emb (bf16)
            pl.BlockSpec((block_b, S_e), lambda b: (b, 0)),          # entity valid mask
            pl.BlockSpec((block_b, S_c, D), lambda b: (b, 0, 0)),    # context emb (bf16)
            pl.BlockSpec((block_b, S_c), lambda b: (b, 0)),          # context valid mask
            pl.BlockSpec((D, D), lambda b: (0, 0)),                  # w_ev_ent  (bf16)
            pl.BlockSpec((D, D), lambda b: (0, 0)),                  # w_ev_ctx  (bf16)
            pl.BlockSpec((1, D), lambda b: (0, 0)),                  # b_ev      (f32)
            pl.BlockSpec((D, 4 * H), lambda b: (0, 0)),              # w_xe      (bf16)
            pl.BlockSpec((A + H, 4 * H), lambda b: (0, 0)),          # w_rec     (bf16)
            pl.BlockSpec((1, 4 * H), lambda b: (0, 0)),              # b_lstm    (f32)
            pl.BlockSpec((H, A), lambda b: (0, 0)),                  # w_out     (bf16)
            pl.BlockSpec((1, A), lambda b: (0, 0)),                  # b_out     (f32)
        ],
        out_specs=pl.BlockSpec((block_b, out_pad), lambda b: (b, 0)),
    )

    code_flat = pl.pallas_call(
        kernel,
        grid_spec=grid_spec,
        out_shape=jax.ShapeDtypeStruct((B, out_pad), jnp.float32),
        compiler_params=pltpu.CompilerParams(
            dimension_semantics=("parallel",),
            vmem_limit_bytes=vmem_limit),
    )(ent_bf, ent_valid, ctx_bf, ctx_valid,
      params["w_ev_ent"], params["w_ev_ctx"], params["b_ev"],
      params["w_xe"], params["w_rec"], params["b_lstm"],
      params["w_out"], params["b_out"])

    # Strip lane padding, then contiguous reshape (no transpose).
    t_code_prob = code_flat[:, :n_digits * A].reshape(B, n_digits, A)
    # No discretizer: latent code == soft code probability (single output, reused).
    return t_code_prob, t_code_prob


# -----------------------------------------------------------------------------
# HierarchicalCodeEncoder wrapper (LSTMEncoder path + EntityVectorEncoder).
# -----------------------------------------------------------------------------
class HierarchicalCodeEncoderPallas:
    def __init__(self, *, n_dim_emb, n_dim_hidden, n_digits, n_ary, key):
        self.n_dim_emb = n_dim_emb
        self.n_dim_hidden = n_dim_hidden
        self.n_digits = n_digits
        self.n_ary = n_ary

        ks = jax.random.split(key, 6)
        s = 0.1
        D, H, A = n_dim_emb, n_dim_hidden, n_ary
        # Matmul weights stored bf16 (f32 accumulation in-kernel); biases stay f32.
        # LSTM gate order along the 4H axis: [i | f | o | g].
        self.params = {
            # EntityVectorEncoder: linear over concat of pooled entity & context
            "w_ev_ent": (s * jax.random.normal(ks[0], (D, D), jnp.float32)).astype(jnp.bfloat16),
            "w_ev_ctx": (s * jax.random.normal(ks[1], (D, D), jnp.float32)).astype(jnp.bfloat16),
            "b_ev": jnp.zeros((1, D), jnp.float32),
            # LSTMEncoder: hoistable input weights + fused recurrent slab [prev | h]
            "w_xe": (s * jax.random.normal(ks[2], (D, 4 * H), jnp.float32)).astype(jnp.bfloat16),
            "w_rec": (s * jax.random.normal(ks[3], (A + H, 4 * H), jnp.float32)).astype(jnp.bfloat16),
            "b_lstm": jnp.zeros((1, 4 * H), jnp.float32),   # = bias_ih + bias_hh on import
            "w_out": (s * jax.random.normal(ks[4], (H, A), jnp.float32)).astype(jnp.bfloat16),
            "b_out": jnp.zeros((1, A), jnp.float32),
        }

    def forward(self, entity_embeddings, entity_sequence_mask,
                context_embeddings, context_sequence_mask,
                on_inference=False, apply_argmax_on_inference=False):
        # TODO(synk): apply_argmax_on_inference (hard one-hot latent-code feedback)
        #             not implemented.
        return hierarchical_code_forward(
            entity_embeddings, entity_sequence_mask,
            context_embeddings, context_sequence_mask,
            self.params, n_digits=self.n_digits, n_ary=self.n_ary)

    __call__ = forward


if __name__ == "__main__":
    B, S_e, S_c = 8, 4, 8
    D, H = 32, 32
    N_DIGITS, N_ARY = 4, 16

    key = jax.random.PRNGKey(0)
    k_model, k_ent, k_ctx = jax.random.split(key, 3)

    model = HierarchicalCodeEncoderPallas(
        n_dim_emb=D, n_dim_hidden=H, n_digits=N_DIGITS, n_ary=N_ARY, key=k_model)

    entity_embeddings = jax.random.normal(k_ent, (B, S_e, D), jnp.float32)
    context_embeddings = jax.random.normal(k_ctx, (B, S_c, D), jnp.float32)
    # True = padding; pad the last entity token and the last 2 context tokens.
    entity_sequence_mask = jnp.zeros((B, S_e), jnp.bool_).at[:, -1:].set(True)
    context_sequence_mask = jnp.zeros((B, S_c), jnp.bool_).at[:, -2:].set(True)

    t_latent_code, t_code_prob = model(entity_embeddings, entity_sequence_mask,
                                       context_embeddings, context_sequence_mask)
    jax.block_until_ready((t_latent_code, t_code_prob))

    assert t_latent_code.shape == (B, N_DIGITS, N_ARY)
    assert t_code_prob.shape == (B, N_DIGITS, N_ARY)
    assert bool(jnp.all(jnp.isfinite(t_code_prob)))
    # each digit's distribution over the arity must sum to ~1 (exact softmax divide)
    sums = jnp.sum(t_code_prob, axis=-1)
    assert bool(jnp.all(jnp.abs(sums - 1.0) < 1e-3))

    print("KERNEL_OK")
</pallas_src>

<mosaic_0001>
module attributes {stable_mosaic.version = 11 : i64} {
  func.func @_hier_code_kernel(%arg0: i32, %arg1: memref<8x4x32xbf16, #tpu.memory_space<vmem>>, %arg2: memref<8x4xbf16, #tpu.memory_space<vmem>>, %arg3: memref<8x8x32xbf16, #tpu.memory_space<vmem>>, %arg4: memref<8x8xbf16, #tpu.memory_space<vmem>>, %arg5: memref<32x32xbf16, #tpu.memory_space<vmem>>, %arg6: memref<32x32xbf16, #tpu.memory_space<vmem>>, %arg7: memref<1x32xf32, #tpu.memory_space<vmem>>, %arg8: memref<32x128xbf16, #tpu.memory_space<vmem>>, %arg9: memref<48x128xbf16, #tpu.memory_space<vmem>>, %arg10: memref<1x128xf32, #tpu.memory_space<vmem>>, %arg11: memref<32x16xbf16, #tpu.memory_space<vmem>>, %arg12: memref<1x16xf32, #tpu.memory_space<vmem>>, %arg13: memref<8x128xf32, #tpu.memory_space<vmem>>) attributes {dimension_semantics = [#tpu.dimension_semantics<parallel>], iteration_bounds = array<i64: 1>, scalar_prefetch = 0 : i64, scratch_operands = 0 : i64, tpu.core_type = #tpu.core_type<tc>, window_params = [{transform_indices = @transform_0, window_bounds = array<i64: 8, 4, 32>}, {transform_indices = @transform_1, window_bounds = array<i64: 8, 4>}, {transform_indices = @transform_2, window_bounds = array<i64: 8, 8, 32>}, {transform_indices = @transform_3, window_bounds = array<i64: 8, 8>}, {pipeline_mode = #tpu.pipeline_mode<synchronous>, transform_indices = @transform_4, window_bounds = array<i64: 32, 32>}, {pipeline_mode = #tpu.pipeline_mode<synchronous>, transform_indices = @transform_5, window_bounds = array<i64: 32, 32>}, {pipeline_mode = #tpu.pipeline_mode<synchronous>, transform_indices = @transform_6, window_bounds = array<i64: 1, 32>}, {pipeline_mode = #tpu.pipeline_mode<synchronous>, transform_indices = @transform_7, window_bounds = array<i64: 32, 128>}, {pipeline_mode = #tpu.pipeline_mode<synchronous>, transform_indices = @transform_8, window_bounds = array<i64: 48, 128>}, {pipeline_mode = #tpu.pipeline_mode<synchronous>, transform_indices = @transform_9, window_bounds = array<i64: 1, 128>}, {pipeline_mode = #tpu.pipeline_mode<synchronous>, transform_indices = @transform_10, window_bounds = array<i64: 32, 16>}, {pipeline_mode = #tpu.pipeline_mode<synchronous>, transform_indices = @transform_11, window_bounds = array<i64: 1, 16>}, {transform_indices = @transform_12, window_bounds = array<i64: 8, 128>}]} {
    %c0 = arith.constant 0 : index
    %c0_0 = arith.constant 0 : index
    %c0_1 = arith.constant 0 : index
    %0 = vector.load %arg1[%c0, %c0_0, %c0_1] : memref<8x4x32xbf16, #tpu.memory_space<vmem>>, vector<8x4x32xbf16>
    %1 = arith.extf %0 : vector<8x4x32xbf16> to vector<8x4x32xf32>
    %c0_2 = arith.constant 0 : index
    %c0_3 = arith.constant 0 : index
    %2 = vector.load %arg2[%c0_2, %c0_3] : memref<8x4xbf16, #tpu.memory_space<vmem>>, vector<8x4xbf16>
    %3 = arith.extf %2 : vector<8x4xbf16> to vector<8x4xf32>
    %cst = arith.constant dense<0.000000e+00> : vector<8xf32>
    %4 = vector.multi_reduction <add>, %3, %cst [1] : vector<8x4xf32> to vector<8xf32>
    %5 = vector.shape_cast %4 : vector<8xf32> to vector<8x1xf32>
    %cst_4 = arith.constant 1.000000e+00 : f32
    %6 = vector.broadcast %cst_4 : f32 to vector<8x1xf32>
    %7 = arith.maximumf %5, %6 : vector<8x1xf32>
    %8 = vector.broadcast %7 : vector<8x1xf32> to vector<8x4xf32>
    %9 = arith.divf %3, %8 : vector<8x4xf32>
    %10 = vector.shape_cast %9 : vector<8x4xf32> to vector<8x4x1xf32>
    %11 = vector.broadcast %10 : vector<8x4x1xf32> to vector<8x4x32xf32>
    %12 = arith.mulf %1, %11 : vector<8x4x32xf32>
    %cst_5 = arith.constant dense<0.000000e+00> : vector<8x32xf32>
    %13 = vector.multi_reduction <add>, %12, %cst_5 [1] : vector<8x4x32xf32> to vector<8x32xf32>
    %c0_6 = arith.constant 0 : index
    %c0_7 = arith.constant 0 : index
    %c0_8 = arith.constant 0 : index
    %14 = vector.load %arg3[%c0_6, %c0_7, %c0_8] : memref<8x8x32xbf16, #tpu.memory_space<vmem>>, vector<8x8x32xbf16>
    %15 = arith.extf %14 : vector<8x8x32xbf16> to vector<8x8x32xf32>
    %c0_9 = arith.constant 0 : index
    %c0_10 = arith.constant 0 : index
    %16 = vector.load %arg4[%c0_9, %c0_10] : memref<8x8xbf16, #tpu.memory_space<vmem>>, vector<8x8xbf16>
    %17 = arith.extf %16 : vector<8x8xbf16> to vector<8x8xf32>
    %cst_11 = arith.constant dense<0.000000e+00> : vector<8xf32>
    %18 = vector.multi_reduction <add>, %17, %cst_11 [1] : vector<8x8xf32> to vector<8xf32>
    %19 = vector.shape_cast %18 : vector<8xf32> to vector<8x1xf32>
    %cst_12 = arith.constant 1.000000e+00 : f32
    %20 = vector.broadcast %cst_12 : f32 to vector<8x1xf32>
    %21 = arith.maximumf %19, %20 : vector<8x1xf32>
    %22 = vector.broadcast %21 : vector<8x1xf32> to vector<8x8xf32>
    %23 = arith.divf %17, %22 : vector<8x8xf32>
    %24 = vector.shape_cast %23 : vector<8x8xf32> to vector<8x8x1xf32>
    %25 = vector.broadcast %24 : vector<8x8x1xf32> to vector<8x8x32xf32>
    %26 = arith.mulf %15, %25 : vector<8x8x32xf32>
    %cst_13 = arith.constant dense<0.000000e+00> : vector<8x32xf32>
    %27 = vector.multi_reduction <add>, %26, %cst_13 [1] : vector<8x8x32xf32> to vector<8x32xf32>
    %28 = arith.truncf %13 : vector<8x32xf32> to vector<8x32xbf16>
    %c0_14 = arith.constant 0 : index
    %c0_15 = arith.constant 0 : index
    %29 = vector.load %arg5[%c0_14, %c0_15] : memref<32x32xbf16, #tpu.memory_space<vmem>>, vector<32x32xbf16>
    %cst_16 = arith.constant dense<0.000000e+00> : vector<8x32xf32>
    %30 = tpu.matmul %28, %29, %cst_16 {dimension_numbers = #tpu.dot_dimension_numbers<[1], [0], [0], [1], [0, 0, 1, 1], [], []>} : vector<8x32xbf16>, vector<32x32xbf16>, vector<8x32xf32> -> vector<8x32xf32>
    %31 = arith.truncf %27 : vector<8x32xf32> to vector<8x32xbf16>
    %c0_17 = arith.constant 0 : index
    %c0_18 = arith.constant 0 : index
    %32 = vector.load %arg6[%c0_17, %c0_18] : memref<32x32xbf16, #tpu.memory_space<vmem>>, vector<32x32xbf16>
    %cst_19 = arith.constant dense<0.000000e+00> : vector<8x32xf32>
    %33 = tpu.matmul %31, %32, %cst_19 {dimension_numbers = #tpu.dot_dimension_numbers<[1], [0], [0], [1], [0, 0, 1, 1], [], []>} : vector<8x32xbf16>, vector<32x32xbf16>, vector<8x32xf32> -> vector<8x32xf32>
    %34 = arith.addf %30, %33 : vector<8x32xf32>
    %c0_20 = arith.constant 0 : index
    %c0_21 = arith.constant 0 : index
    %35 = vector.load %arg7[%c0_20, %c0_21] : memref<1x32xf32, #tpu.memory_space<vmem>>, vector<1x32xf32>
    %36 = vector.broadcast %35 : vector<1x32xf32> to vector<8x32xf32>
    %37 = arith.addf %34, %36 : vector<8x32xf32>
    %38 = math.tanh %37 : vector<8x32xf32>
    %39 = arith.truncf %38 : vector<8x32xf32> to vector<8x32xbf16>
    %c0_22 = arith.constant 0 : index
    %c0_23 = arith.constant 0 : index
    %40 = vector.load %arg8[%c0_22, %c0_23] : memref<32x128xbf16, #tpu.memory_space<vmem>>, vector<32x128xbf16>
    %cst_24 = arith.constant dense<0.000000e+00> : vector<8x128xf32>
    %41 = tpu.matmul %39, %40, %cst_24 {dimension_numbers = #tpu.dot_dimension_numbers<[1], [0], [0], [1], [0, 0, 1, 1], [], []>} : vector<8x32xbf16>, vector<32x128xbf16>, vector<8x128xf32> -> vector<8x128xf32>
    %c0_25 = arith.constant 0 : index
    %c0_26 = arith.constant 0 : index
    %42 = vector.load %arg10[%c0_25, %c0_26] : memref<1x128xf32, #tpu.memory_space<vmem>>, vector<1x128xf32>
    %43 = vector.broadcast %42 : vector<1x128xf32> to vector<8x128xf32>
    %44 = arith.addf %41, %43 : vector<8x128xf32>
    %c0_27 = arith.constant 0 : index
    %c0_28 = arith.constant 0 : index
    %45 = vector.load %arg12[%c0_27, %c0_28] : memref<1x16xf32, #tpu.memory_space<vmem>>, vector<1x16xf32>
    %46 = vector.shape_cast %45 : vector<1x16xf32> to vector<1x16xf32>
    %47 = vector.broadcast %46 : vector<1x16xf32> to vector<8x16xf32>
    %cst_29 = arith.constant 0.000000e+00 : f32
    %48 = vector.broadcast %cst_29 : f32 to vector<8x32xf32>
    %cst_30 = arith.constant 0.000000e+00 : f32
    %49 = vector.broadcast %cst_30 : f32 to vector<8x32xf32>
    %cst_31 = arith.constant 0.000000e+00 : f32
    %50 = vector.broadcast %cst_31 : f32 to vector<8x16xf32>
    %51 = tpu.concatenate %50, %48 in 1 : vector<8x16xf32>, vector<8x32xf32> -> vector<8x48xf32>
    %52 = arith.truncf %51 : vector<8x48xf32> to vector<8x48xbf16>
    %c0_32 = arith.constant 0 : index
    %c0_33 = arith.constant 0 : index
    %53 = vector.load %arg9[%c0_32, %c0_33] : memref<48x128xbf16, #tpu.memory_space<vmem>>, vector<48x128xbf16>
    %cst_34 = arith.constant dense<0.000000e+00> : vector<8x128xf32>
    %54 = tpu.matmul %52, %53, %cst_34 {dimension_numbers = #tpu.dot_dimension_numbers<[1], [0], [0], [1], [0, 0, 1, 1], [], []>} : vector<8x48xbf16>, vector<48x128xbf16>, vector<8x128xf32> -> vector<8x128xf32>
    %55 = arith.addf %44, %54 : vector<8x128xf32>
    %56 = arith.negf %55 : vector<8x128xf32>
    %57 = math.exp %56 : vector<8x128xf32>
    %cst_35 = arith.constant 1.000000e+00 : f32
    %58 = vector.broadcast %cst_35 : f32 to vector<8x128xf32>
    %59 = arith.addf %58, %57 : vector<8x128xf32>
    %60 = arith.divf %58, %59 : vector<8x128xf32>
    %61 = vector.extract_strided_slice %55 {offsets = [0, 96], sizes = [8, 32], strides = [1, 1]} : vector<8x128xf32> to vector<8x32xf32>
    %62 = math.tanh %61 : vector<8x32xf32>
    %63 = vector.extract_strided_slice %60 {offsets = [0, 0], sizes = [8, 32], strides = [1, 1]} : vector<8x128xf32> to vector<8x32xf32>
    %64 = vector.extract_strided_slice %60 {offsets = [0, 32], sizes = [8, 32], strides = [1, 1]} : vector<8x128xf32> to vector<8x32xf32>
    %65 = vector.extract_strided_slice %60 {offsets = [0, 64], sizes = [8, 32], strides = [1, 1]} : vector<8x128xf32> to vector<8x32xf32>
    %66 = arith.mulf %64, %49 : vector<8x32xf32>
    %67 = arith.mulf %63, %62 : vector<8x32xf32>
    %68 = arith.addf %66, %67 : vector<8x32xf32>
    %69 = math.tanh %68 : vector<8x32xf32>
    %70 = arith.mulf %65, %69 : vector<8x32xf32>
    %71 = arith.truncf %70 : vector<8x32xf32> to vector<8x32xbf16>
    %c0_36 = arith.constant 0 : index
    %c0_37 = arith.constant 0 : index
    %72 = vector.load %arg11[%c0_36, %c0_37] : memref<32x16xbf16, #tpu.memory_space<vmem>>, vector<32x16xbf16>
    %cst_38 = arith.constant dense<0.000000e+00> : vector<8x16xf32>
    %73 = tpu.matmul %71, %72, %cst_38 {dimension_numbers = #tpu.dot_dimension_numbers<[1], [0], [0], [1], [0, 0, 1, 1], [], []>} : vector<8x32xbf16>, vector<32x16xbf16>, vector<8x16xf32> -> vector<8x16xf32>
    %74 = arith.addf %73, %47 : vector<8x16xf32>
    %cst_39 = arith.constant dense<0xFF800000> : vector<8xf32>
    %75 = vector.multi_reduction <maximumf>, %74, %cst_39 [1] : vector<8x16xf32> to vector<8xf32>
    %76 = vector.shape_cast %75 : vector<8xf32> to vector<8x1xf32>
    %77 = vector.broadcast %76 : vector<8x1xf32> to vector<8x16xf32>
    %78 = arith.subf %74, %77 : vector<8x16xf32>
    %79 = math.exp %78 : vector<8x16xf32>
    %cst_40 = arith.constant dense<0.000000e+00> : vector<8xf32>
    %80 = vector.multi_reduction <add>, %79, %cst_40 [1] : vector<8x16xf32> to vector<8xf32>
    %81 = vector.shape_cast %80 : vector<8xf32> to vector<8x1xf32>
    %82 = vector.broadcast %81 : vector<8x1xf32> to vector<8x16xf32>
    %83 = arith.divf %79, %82 : vector<8x16xf32>
    %84 = tpu.concatenate %83, %70 in 1 : vector<8x16xf32>, vector<8x32xf32> -> vector<8x48xf32>
    %85 = arith.truncf %84 : vector<8x48xf32> to vector<8x48xbf16>
    %c0_41 = arith.constant 0 : index
    %c0_42 = arith.constant 0 : index
    %86 = vector.load %arg9[%c0_41, %c0_42] : memref<48x128xbf16, #tpu.memory_space<vmem>>, vector<48x128xbf16>
    %cst_43 = arith.constant dense<0.000000e+00> : vector<8x128xf32>
    %87 = tpu.matmul %85, %86, %cst_43 {dimension_numbers = #tpu.dot_dimension_numbers<[1], [0], [0], [1], [0, 0, 1, 1], [], []>} : vector<8x48xbf16>, vector<48x128xbf16>, vector<8x128xf32> -> vector<8x128xf32>
    %88 = arith.addf %44, %87 : vector<8x128xf32>
    %89 = arith.negf %88 : vector<8x128xf32>
    %90 = math.exp %89 : vector<8x128xf32>
    %cst_44 = arith.constant 1.000000e+00 : f32
    %91 = vector.broadcast %cst_44 : f32 to vector<8x128xf32>
    %92 = arith.addf %91, %90 : vector<8x128xf32>
    %93 = arith.divf %91, %92 : vector<8x128xf32>
    %94 = vector.extract_strided_slice %88 {offsets = [0, 96], sizes = [8, 32], strides = [1, 1]} : vector<8x128xf32> to vector<8x32xf32>
    %95 = math.tanh %94 : vector<8x32xf32>
    %96 = vector.extract_strided_slice %93 {offsets = [0, 0], sizes = [8, 32], strides = [1, 1]} : vector<8x128xf32> to vector<8x32xf32>
    %97 = vector.extract_strided_slice %93 {offsets = [0, 32], sizes = [8, 32], strides = [1, 1]} : vector<8x128xf32> to vector<8x32xf32>
    %98 = vector.extract_strided_slice %93 {offsets = [0, 64], sizes = [8, 32], strides = [1, 1]} : vector<8x128xf32> to vector<8x32xf32>
    %99 = arith.mulf %97, %68 : vector<8x32xf32>
    %100 = arith.mulf %96, %95 : vector<8x32xf32>
    %101 = arith.addf %99, %100 : vector<8x32xf32>
    %102 = math.tanh %101 : vector<8x32xf32>
    %103 = arith.mulf %98, %102 : vector<8x32xf32>
    %104 = arith.truncf %103 : vector<8x32xf32> to vector<8x32xbf16>
    %c0_45 = arith.constant 0 : index
    %c0_46 = arith.constant 0 : index
    %105 = vector.load %arg11[%c0_45, %c0_46] : memref<32x16xbf16, #tpu.memory_space<vmem>>, vector<32x16xbf16>
    %cst_47 = arith.constant dense<0.000000e+00> : vector<8x16xf32>
    %106 = tpu.matmul %104, %105, %cst_47 {dimension_numbers = #tpu.dot_dimension_numbers<[1], [0], [0], [1], [0, 0, 1, 1], [], []>} : vector<8x32xbf16>, vector<32x16xbf16>, vector<8x16xf32> -> vector<8x16xf32>
    %107 = arith.addf %106, %47 : vector<8x16xf32>
    %cst_48 = arith.constant dense<0xFF800000> : vector<8xf32>
    %108 = vector.multi_reduction <maximumf>, %107, %cst_48 [1] : vector<8x16xf32> to vector<8xf32>
    %109 = vector.shape_cast %108 : vector<8xf32> to vector<8x1xf32>
    %110 = vector.broadcast %109 : vector<8x1xf32> to vector<8x16xf32>
    %111 = arith.subf %107, %110 : vector<8x16xf32>
    %112 = math.exp %111 : vector<8x16xf32>
    %cst_49 = arith.constant dense<0.000000e+00> : vector<8xf32>
    %113 = vector.multi_reduction <add>, %112, %cst_49 [1] : vector<8x16xf32> to vector<8xf32>
    %114 = vector.shape_cast %113 : vector<8xf32> to vector<8x1xf32>
    %115 = vector.broadcast %114 : vector<8x1xf32> to vector<8x16xf32>
    %116 = arith.divf %112, %115 : vector<8x16xf32>
    %117 = tpu.concatenate %116, %103 in 1 : vector<8x16xf32>, vector<8x32xf32> -> vector<8x48xf32>
    %118 = arith.truncf %117 : vector<8x48xf32> to vector<8x48xbf16>
    %c0_50 = arith.constant 0 : index
    %c0_51 = arith.constant 0 : index
    %119 = vector.load %arg9[%c0_50, %c0_51] : memref<48x128xbf16, #tpu.memory_space<vmem>>, vector<48x128xbf16>
    %cst_52 = arith.constant dense<0.000000e+00> : vector<8x128xf32>
    %120 = tpu.matmul %118, %119, %cst_52 {dimension_numbers = #tpu.dot_dimension_numbers<[1], [0], [0], [1], [0, 0, 1, 1], [], []>} : vector<8x48xbf16>, vector<48x128xbf16>, vector<8x128xf32> -> vector<8x128xf32>
    %121 = arith.addf %44, %120 : vector<8x128xf32>
    %122 = arith.negf %121 : vector<8x128xf32>
    %123 = math.exp %122 : vector<8x128xf32>
    %cst_53 = arith.constant 1.000000e+00 : f32
    %124 = vector.broadcast %cst_53 : f32 to vector<8x128xf32>
    %125 = arith.addf %124, %123 : vector<8x128xf32>
    %126 = arith.divf %124, %125 : vector<8x128xf32>
    %127 = vector.extract_strided_slice %121 {offsets = [0, 96], sizes = [8, 32], strides = [1, 1]} : vector<8x128xf32> to vector<8x32xf32>
    %128 = math.tanh %127 : vector<8x32xf32>
    %129 = vector.extract_strided_slice %126 {offsets = [0, 0], sizes = [8, 32], strides = [1, 1]} : vector<8x128xf32> to vector<8x32xf32>
    %130 = vector.extract_strided_slice %126 {offsets = [0, 32], sizes = [8, 32], strides = [1, 1]} : vector<8x128xf32> to vector<8x32xf32>
    %131 = vector.extract_strided_slice %126 {offsets = [0, 64], sizes = [8, 32], strides = [1, 1]} : vector<8x128xf32> to vector<8x32xf32>
    %132 = arith.mulf %130, %101 : vector<8x32xf32>
    %133 = arith.mulf %129, %128 : vector<8x32xf32>
    %134 = arith.addf %132, %133 : vector<8x32xf32>
    %135 = math.tanh %134 : vector<8x32xf32>
    %136 = arith.mulf %131, %135 : vector<8x32xf32>
    %137 = arith.truncf %136 : vector<8x32xf32> to vector<8x32xbf16>
    %c0_54 = arith.constant 0 : index
    %c0_55 = arith.constant 0 : index
    %138 = vector.load %arg11[%c0_54, %c0_55] : memref<32x16xbf16, #tpu.memory_space<vmem>>, vector<32x16xbf16>
    %cst_56 = arith.constant dense<0.000000e+00> : vector<8x16xf32>
    %139 = tpu.matmul %137, %138, %cst_56 {dimension_numbers = #tpu.dot_dimension_numbers<[1], [0], [0], [1], [0, 0, 1, 1], [], []>} : vector<8x32xbf16>, vector<32x16xbf16>, vector<8x16xf32> -> vector<8x16xf32>
    %140 = arith.addf %139, %47 : vector<8x16xf32>
    %cst_57 = arith.constant dense<0xFF800000> : vector<8xf32>
    %141 = vector.multi_reduction <maximumf>, %140, %cst_57 [1] : vector<8x16xf32> to vector<8xf32>
    %142 = vector.shape_cast %141 : vector<8xf32> to vector<8x1xf32>
    %143 = vector.broadcast %142 : vector<8x1xf32> to vector<8x16xf32>
    %144 = arith.subf %140, %143 : vector<8x16xf32>
    %145 = math.exp %144 : vector<8x16xf32>
    %cst_58 = arith.constant dense<0.000000e+00> : vector<8xf32>
    %146 = vector.multi_reduction <add>, %145, %cst_58 [1] : vector<8x16xf32> to vector<8xf32>
    %147 = vector.shape_cast %146 : vector<8xf32> to vector<8x1xf32>
    %148 = vector.broadcast %147 : vector<8x1xf32> to vector<8x16xf32>
    %149 = arith.divf %145, %148 : vector<8x16xf32>
    %150 = tpu.concatenate %149, %136 in 1 : vector<8x16xf32>, vector<8x32xf32> -> vector<8x48xf32>
    %151 = arith.truncf %150 : vector<8x48xf32> to vector<8x48xbf16>
    %c0_59 = arith.constant 0 : index
    %c0_60 = arith.constant 0 : index
    %152 = vector.load %arg9[%c0_59, %c0_60] : memref<48x128xbf16, #tpu.memory_space<vmem>>, vector<48x128xbf16>
    %cst_61 = arith.constant dense<0.000000e+00> : vector<8x128xf32>
    %153 = tpu.matmul %151, %152, %cst_61 {dimension_numbers = #tpu.dot_dimension_numbers<[1], [0], [0], [1], [0, 0, 1, 1], [], []>} : vector<8x48xbf16>, vector<48x128xbf16>, vector<8x128xf32> -> vector<8x128xf32>
    %154 = arith.addf %44, %153 : vector<8x128xf32>
    %155 = arith.negf %154 : vector<8x128xf32>
    %156 = math.exp %155 : vector<8x128xf32>
    %cst_62 = arith.constant 1.000000e+00 : f32
    %157 = vector.broadcast %cst_62 : f32 to vector<8x128xf32>
    %158 = arith.addf %157, %156 : vector<8x128xf32>
    %159 = arith.divf %157, %158 : vector<8x128xf32>
    %160 = vector.extract_strided_slice %154 {offsets = [0, 96], sizes = [8, 32], strides = [1, 1]} : vector<8x128xf32> to vector<8x32xf32>
    %161 = math.tanh %160 : vector<8x32xf32>
    %162 = vector.extract_strided_slice %159 {offsets = [0, 0], sizes = [8, 32], strides = [1, 1]} : vector<8x128xf32> to vector<8x32xf32>
    %163 = vector.extract_strided_slice %159 {offsets = [0, 32], sizes = [8, 32], strides = [1, 1]} : vector<8x128xf32> to vector<8x32xf32>
    %164 = vector.extract_strided_slice %159 {offsets = [0, 64], sizes = [8, 32], strides = [1, 1]} : vector<8x128xf32> to vector<8x32xf32>
    %165 = arith.mulf %163, %134 : vector<8x32xf32>
    %166 = arith.mulf %162, %161 : vector<8x32xf32>
    %167 = arith.addf %165, %166 : vector<8x32xf32>
    %168 = math.tanh %167 : vector<8x32xf32>
    %169 = arith.mulf %164, %168 : vector<8x32xf32>
    %170 = arith.truncf %169 : vector<8x32xf32> to vector<8x32xbf16>
    %c0_63 = arith.constant 0 : index
    %c0_64 = arith.constant 0 : index
    %171 = vector.load %arg11[%c0_63, %c0_64] : memref<32x16xbf16, #tpu.memory_space<vmem>>, vector<32x16xbf16>
    %cst_65 = arith.constant dense<0.000000e+00> : vector<8x16xf32>
    %172 = tpu.matmul %170, %171, %cst_65 {dimension_numbers = #tpu.dot_dimension_numbers<[1], [0], [0], [1], [0, 0, 1, 1], [], []>} : vector<8x32xbf16>, vector<32x16xbf16>, vector<8x16xf32> -> vector<8x16xf32>
    %173 = arith.addf %172, %47 : vector<8x16xf32>
    %cst_66 = arith.constant dense<0xFF800000> : vector<8xf32>
    %174 = vector.multi_reduction <maximumf>, %173, %cst_66 [1] : vector<8x16xf32> to vector<8xf32>
    %175 = vector.shape_cast %174 : vector<8xf32> to vector<8x1xf32>
    %176 = vector.broadcast %175 : vector<8x1xf32> to vector<8x16xf32>
    %177 = arith.subf %173, %176 : vector<8x16xf32>
    %178 = math.exp %177 : vector<8x16xf32>
    %cst_67 = arith.constant dense<0.000000e+00> : vector<8xf32>
    %179 = vector.multi_reduction <add>, %178, %cst_67 [1] : vector<8x16xf32> to vector<8xf32>
    %180 = vector.shape_cast %179 : vector<8xf32> to vector<8x1xf32>
    %181 = vector.broadcast %180 : vector<8x1xf32> to vector<8x16xf32>
    %182 = arith.divf %178, %181 : vector<8x16xf32>
    %cst_68 = arith.constant 0.000000e+00 : f32
    %183 = vector.broadcast %cst_68 : f32 to vector<8x64xf32>
    %184 = tpu.concatenate %83, %116, %149, %182, %183 in 1 : vector<8x16xf32>, vector<8x16xf32>, vector<8x16xf32>, vector<8x16xf32>, vector<8x64xf32> -> vector<8x128xf32>
    %c0_69 = arith.constant 0 : index
    %c0_70 = arith.constant 0 : index
    %185 = vector.load %arg13[%c0_69, %c0_70] : memref<8x128xf32, #tpu.memory_space<vmem>>, vector<8x128xf32>
    tpu.vector_store %arg13[%c0_69, %c0_70], %184 {strides = array<i32>} : memref<8x128xf32, #tpu.memory_space<vmem>>, vector<8x128xf32>,
    return
  }
  func.func @transform_0(%arg0: i32) -> (i32, i32, i32) {
    %c0_i32 = arith.constant 0 : i32
    %c0_i32_0 = arith.constant 0 : i32
    %c0_i32_1 = arith.constant 0 : i32
    return %arg0, %c0_i32, %c0_i32_0 : i32, i32, i32
  }
  func.func @transform_1(%arg0: i32) -> (i32, i32) {
    %c0_i32 = arith.constant 0 : i32
    %c0_i32_0 = arith.constant 0 : i32
    return %arg0, %c0_i32 : i32, i32
  }
  func.func @transform_2(%arg0: i32) -> (i32, i32, i32) {
    %c0_i32 = arith.constant 0 : i32
    %c0_i32_0 = arith.constant 0 : i32
    %c0_i32_1 = arith.constant 0 : i32
    return %arg0, %c0_i32, %c0_i32_0 : i32, i32, i32
  }
  func.func @transform_3(%arg0: i32) -> (i32, i32) {
    %c0_i32 = arith.constant 0 : i32
    %c0_i32_0 = arith.constant 0 : i32
    return %arg0, %c0_i32 : i32, i32
  }
  func.func @transform_4(%arg0: i32) -> (i32, i32) {
    %c0_i32 = arith.constant 0 : i32
    %c0_i32_0 = arith.constant 0 : i32
    %c0_i32_1 = arith.constant 0 : i32
    return %c0_i32, %c0_i32_0 : i32, i32
  }
  func.func @transform_5(%arg0: i32) -> (i32, i32) {
    %c0_i32 = arith.constant 0 : i32
    %c0_i32_0 = arith.constant 0 : i32
    %c0_i32_1 = arith.constant 0 : i32
    return %c0_i32, %c0_i32_0 : i32, i32
  }
  func.func @transform_6(%arg0: i32) -> (i32, i32) {
    %c0_i32 = arith.constant 0 : i32
    %c0_i32_0 = arith.constant 0 : i32
    %c0_i32_1 = arith.constant 0 : i32
    return %c0_i32, %c0_i32_0 : i32, i32
  }
  func.func @transform_7(%arg0: i32) -> (i32, i32) {
    %c0_i32 = arith.constant 0 : i32
    %c0_i32_0 = arith.constant 0 : i32
    %c0_i32_1 = arith.constant 0 : i32
    return %c0_i32, %c0_i32_0 : i32, i32
  }
  func.func @transform_8(%arg0: i32) -> (i32, i32) {
    %c0_i32 = arith.constant 0 : i32
    %c0_i32_0 = arith.constant 0 : i32
    %c0_i32_1 = arith.constant 0 : i32
    return %c0_i32, %c0_i32_0 : i32, i32
  }
  func.func @transform_9(%arg0: i32) -> (i32, i32) {
    %c0_i32 = arith.constant 0 : i32
    %c0_i32_0 = arith.constant 0 : i32
    %c0_i32_1 = arith.constant 0 : i32
    return %c0_i32, %c0_i32_0 : i32, i32
  }
  func.func @transform_10(%arg0: i32) -> (i32, i32) {
    %c0_i32 = arith.constant 0 : i32
    %c0_i32_0 = arith.constant 0 : i32
    %c0_i32_1 = arith.constant 0 : i32
    return %c0_i32, %c0_i32_0 : i32, i32
  }
  func.func @transform_11(%arg0: i32) -> (i32, i32) {
    %c0_i32 = arith.constant 0 : i32
    %c0_i32_0 = arith.constant 0 : i32
    %c0_i32_1 = arith.constant 0 : i32
    return %c0_i32, %c0_i32_0 : i32, i32
  }
  func.func @transform_12(%arg0: i32) -> (i32, i32) {
    %c0_i32 = arith.constant 0 : i32
    %c0_i32_0 = arith.constant 0 : i32
    return %arg0, %c0_i32 : i32, i32
  }
}

</mosaic_0001>

<llo_original>
// kernel: tpu_custom_call.1
$region0: #{tpu_custom_call.1}
  #allocation0 [shape = 'u32[]', space=smem, size = 0x4, offset = 0x4, fixed_abs, tag = 'smem constant byte address 0x4 - core index']
  #allocation1 [shape = 'u32[144,128]{1,0:T(1,128)}', space=vmem, size = 0x12000, scoped, tag = 'internal scratch']
  %s0 = inlined_call_operand.hbm [shape: bf16[8,4,32], index: 0, kind: input, shape index: {}]
  %s1 = inlined_call_operand.vmem [shape: bf16[8,4], index: 1, kind: input, shape index: {}]
  %s2 = inlined_call_operand.vmem [shape: bf16[8,8,32], index: 2, kind: input, shape index: {}]
  %s3 = inlined_call_operand.hbm [shape: bf16[8,8], index: 3, kind: input, shape index: {}]
  %s4 = inlined_call_operand.hbm [shape: bf16[32,32], index: 4, kind: input, shape index: {}]
  %s5 = inlined_call_operand.hbm [shape: bf16[32,32], index: 5, kind: input, shape index: {}]
  %s6 = inlined_call_operand.hbm [shape: f32[1,32], index: 6, kind: input, shape index: {}]
  %s7 = inlined_call_operand.hbm [shape: bf16[32,128], index: 7, kind: input, shape index: {}]
  %s8 = inlined_call_operand.hbm [shape: bf16[48,128], index: 8, kind: input, shape index: {}]
  %s9 = inlined_call_operand.vmem [shape: f32[1,128], index: 9, kind: input, shape index: {}]
  %s10 = inlined_call_operand.vmem [shape: bf16[32,16], index: 10, kind: input, shape index: {}]
  %s11 = inlined_call_operand.vmem [shape: f32[1,16], index: 11, kind: input, shape index: {}]
  %s12 = inlined_call_operand.hbm [shape: f32[8,128], index: 12, kind: output, shape index: {}]
  %s13 = sld [smem:[#allocation0]]
  $region86: #{tpu_custom_call.1} parent=0
    _
  %s15 = ssub.s32 1, %s13
  %s16 = scalar_select 0, %s15, %s13
  $region1: #{tpu_custom_call.1} parent=0
    #allocation2 [shape = 'u8[8192]{0}', space=vmem, size = 0x2000, scoped, tag = 'input window, operand 0, single buffered']
    #allocation3 [shape = 's32[1]{0}', space=sflag, size = 0x4, scoped, tag = 'scoped memory for tpu_custom_call.1']
    #allocation4 [shape = 's32[1]{0}', space=sflag, size = 0x4, scoped, tag = 'scoped memory for tpu_custom_call.1']
    #allocation5 [shape = 'u8[2048]{0}', space=vmem, size = 0x800, scoped, tag = 'input window, operand 3, single buffered']
    #allocation6 [shape = 's32[1]{0}', space=sflag, size = 0x4, scoped, tag = 'scoped memory for tpu_custom_call.1']
    #allocation7 [shape = 'u8[8192]{0}', space=vmem, size = 0x2000, scoped, tag = 'input window, operand 4, single buffered']
    #allocation8 [shape = 'u8[8192]{0}', space=vmem, size = 0x2000, scoped, tag = 'input window, operand 5, single buffered']
    #allocation9 [shape = 's32[1]{0}', space=sflag, size = 0x4, scoped, tag = 'scoped memory for tpu_custom_call.1']
    #allocation10 [shape = 'u8[512]{0}', space=vmem, size = 0x400, scoped, tag = 'input window, operand 6, single buffered']
    #allocation11 [shape = 'u8[8192]{0}', space=vmem, size = 0x2000, scoped, tag = 'input window, operand 7, single buffered']
    #allocation12 [shape = 's32[1]{0}', space=sflag, size = 0x4, scoped, tag = 'scoped memory for tpu_custom_call.1']
    #allocation13 [shape = 'u8[12288]{0}', space=vmem, size = 0x3000, scoped, tag = 'input window, operand 8, single buffered']
    #allocation14 [shape = 'u8[4096]{0}', space=vmem, size = 0x1000, scoped, tag = 'output window, operand 0, single buffered']
    %17 = vsyncpa [#allocation3], 0
    %18 = vsyncpa [#allocation6], 0
    %19 = vsyncpa [#allocation9], 0
    %20 = vsyncpa [#allocation12], 0
    %21 = vsyncpa [#allocation4], 0
    // Predicated region
    $region2: #{tpu_custom_call.1} parent=1 // pred_check
      _
    $region3: #{tpu_custom_call.1} parent=1 // pred_check_branch
      %23 = sbr.rel (0) target = $region5
    $region4: #{tpu_custom_call.1} parent=1 // pred_region
      %s25 = ssub.s32 256, 256
      %26 = vsyncadd [#allocation3], %s25
      %s27 = sshll.u32 [#allocation2], 4
      %s28 = int_to_ptr.vmem [resolvable:$true] %s27
      %33 = dma.hbm_to_vmem [thread:$0]  %s0, 256, %s28, [#allocation3], 32, 32, 2
    $region5: #{tpu_custom_call.1} parent=1 // pred_fallthru
      _
    // Predicated region
    $region6: #{tpu_custom_call.1} parent=1 // pred_check
      _
    $region7: #{tpu_custom_call.1} parent=1 // pred_check_branch
      %35 = sbr.rel (0) target = $region9
    $region8: #{tpu_custom_call.1} parent=1 // pred_region
      _
    $region9: #{tpu_custom_call.1} parent=1 // pred_fallthru
      _
    // Predicated region
    $region10: #{tpu_custom_call.1} parent=1 // pred_check
      _
    $region11: #{tpu_custom_call.1} parent=1 // pred_check_branch
      %37 = sbr.rel (0) target = $region13
    $region12: #{tpu_custom_call.1} parent=1 // pred_region
      _
    $region13: #{tpu_custom_call.1} parent=1 // pred_fallthru
      _
    // Predicated region
    $region14: #{tpu_custom_call.1} parent=1 // pred_check
      _
    $region15: #{tpu_custom_call.1} parent=1 // pred_check_branch
      %39 = sbr.rel (0) target = $region17
    $region16: #{tpu_custom_call.1} parent=1 // pred_region
      %s41 = ssub.s32 64, 64
      %42 = vsyncadd [#allocation6], %s41
      %s44 = sshll.u32 [#allocation5], 4
      %s45 = int_to_ptr.vmem [resolvable:$true] %s44
      %47 = dma.hbm_to_vmem [thread:$0]  %s3, 64, %s45, [#allocation6]
    $region17: #{tpu_custom_call.1} parent=1 // pred_fallthru
      _
    // Predicated region
    $region18: #{tpu_custom_call.1} parent=1 // pred_check
      _
    $region19: #{tpu_custom_call.1} parent=1 // pred_check_branch
      %49 = sbr.rel (0) target = $region21
    $region20: #{tpu_custom_call.1} parent=1 // pred_region
      %s51 = ssub.s32 256, 256
      %52 = vsyncadd [#allocation6], %s51
      %s53 = sshll.u32 [#allocation7], 4
      %s54 = int_to_ptr.vmem [resolvable:$true] %s53
      %59 = dma.hbm_to_vmem [thread:$0]  %s4, 256, %s54, [#allocation6], 64, 64, 4
    $region21: #{tpu_custom_call.1} parent=1 // pred_fallthru
      _
    // Predicated region
    $region22: #{tpu_custom_call.1} parent=1 // pred_check
      _
    $region23: #{tpu_custom_call.1} parent=1 // pred_check_branch
      %61 = sbr.rel (0) target = $region25
    $region24: #{tpu_custom_call.1} parent=1 // pred_region
      %s63 = ssub.s32 256, 256
      %64 = vsyncadd [#allocation9], %s63
      %s65 = sshll.u32 [#allocation8], 4
      %s66 = int_to_ptr.vmem [resolvable:$true] %s65
      %71 = dma.hbm_to_vmem [thread:$0]  %s5, 256, %s66, [#allocation9], 64, 64, 4
    $region25: #{tpu_custom_call.1} parent=1 // pred_fallthru
      _
    // Predicated region
    $region26: #{tpu_custom_call.1} parent=1 // pred_check
      _
    $region27: #{tpu_custom_call.1} parent=1 // pred_check_branch
      %73 = sbr.rel (0) target = $region29
    $region28: #{tpu_custom_call.1} parent=1 // pred_region
      %s75 = ssub.s32 16, 16
      %76 = vsyncadd [#allocation9], %s75
      %s78 = sshll.u32 [#allocation10], 4
      %s79 = int_to_ptr.vmem [resolvable:$true] %s78
      %81 = dma.hbm_to_vmem [thread:$0]  %s6, 16, %s79, [#allocation9]
    $region29: #{tpu_custom_call.1} parent=1 // pred_fallthru
      _
    // Predicated region
    $region30: #{tpu_custom_call.1} parent=1 // pred_check
      _
    $region31: #{tpu_custom_call.1} parent=1 // pred_check_branch
      %83 = sbr.rel (0) target = $region33
    $region32: #{tpu_custom_call.1} parent=1 // pred_region
      %s85 = ssub.s32 256, 256
      %86 = vsyncadd [#allocation12], %s85
      %s87 = sshll.u32 [#allocation11], 4
      %s88 = int_to_ptr.vmem [resolvable:$true] %s87
      %93 = dma.hbm_to_vmem [thread:$0]  %s7, 256, %s88, [#allocation12], 64, 64, 4
    $region33: #{tpu_custom_call.1} parent=1 // pred_fallthru
      _
    // Predicated region
    $region34: #{tpu_custom_call.1} parent=1 // pred_check
      _
    $region35: #{tpu_custom_call.1} parent=1 // pred_check_branch
      %95 = sbr.rel (0) target = $region37
    $region36: #{tpu_custom_call.1} parent=1 // pred_region
      %s97 = ssub.s32 384, 384
      %98 = vsyncadd [#allocation12], %s97
      %s99 = sshll.u32 [#allocation13], 4
      %s100 = int_to_ptr.vmem [resolvable:$true] %s99
      %105 = dma.hbm_to_vmem [thread:$0]  %s8, 384, %s100, [#allocation12], 64, 64, 4
    $region37: #{tpu_custom_call.1} parent=1 // pred_fallthru
      _
    // Predicated region
    $region38: #{tpu_custom_call.1} parent=1 // pred_check
      _
    $region39: #{tpu_custom_call.1} parent=1 // pred_check_branch
      %107 = sbr.rel (0) target = $region41
    $region40: #{tpu_custom_call.1} parent=1 // pred_region
      _
    $region41: #{tpu_custom_call.1} parent=1 // pred_fallthru
      _
    // Predicated region
    $region42: #{tpu_custom_call.1} parent=1 // pred_check
      _
    $region43: #{tpu_custom_call.1} parent=1 // pred_check_branch
      %109 = sbr.rel (0) target = $region45
    $region44: #{tpu_custom_call.1} parent=1 // pred_region
      _
    $region45: #{tpu_custom_call.1} parent=1 // pred_fallthru
      _
    // Predicated region
    $region46: #{tpu_custom_call.1} parent=1 // pred_check
      _
    $region47: #{tpu_custom_call.1} parent=1 // pred_check_branch
      %111 = sbr.rel (0) target = $region49
    $region48: #{tpu_custom_call.1} parent=1 // pred_region
      _
    $region49: #{tpu_custom_call.1} parent=1 // pred_fallthru
      _
    // Predicated region
    $region50: #{tpu_custom_call.1} parent=1 // pred_check
      _
    $region51: #{tpu_custom_call.1} parent=1 // pred_check_branch
      %113 = sbr.rel (0) target = $region53
    $region52: #{tpu_custom_call.1} parent=1 // pred_region
      %114 = dma.done [#allocation3], 256
    $region53: #{tpu_custom_call.1} parent=1 // pred_fallthru
      _
    // Predicated region
    $region54: #{tpu_custom_call.1} parent=1 // pred_check
      _
    $region55: #{tpu_custom_call.1} parent=1 // pred_check_branch
      %116 = sbr.rel (0) target = $region57
    $region56: #{tpu_custom_call.1} parent=1 // pred_region
      %117 = dma.done [#allocation6], 64
    $region57: #{tpu_custom_call.1} parent=1 // pred_fallthru
      _
    // Predicated region
    $region58: #{tpu_custom_call.1} parent=1 // pred_check
      _
    $region59: #{tpu_custom_call.1} parent=1 // pred_check_branch
      %119 = sbr.rel (0) target = $region61
    $region60: #{tpu_custom_call.1} parent=1 // pred_region
      %120 = dma.done [#allocation6], 256
    $region61: #{tpu_custom_call.1} parent=1 // pred_fallthru
      _
    // Predicated region
    $region62: #{tpu_custom_call.1} parent=1 // pred_check
      _
    $region63: #{tpu_custom_call.1} parent=1 // pred_check_branch
      %122 = sbr.rel (0) target = $region65
    $region64: #{tpu_custom_call.1} parent=1 // pred_region
      %123 = dma.done [#allocation9], 256
    $region65: #{tpu_custom_call.1} parent=1 // pred_fallthru
      _
    // Predicated region
    $region66: #{tpu_custom_call.1} parent=1 // pred_check
      _
    $region67: #{tpu_custom_call.1} parent=1 // pred_check_branch
      %125 = sbr.rel (0) target = $region69
    $region68: #{tpu_custom_call.1} parent=1 // pred_region
      %126 = dma.done [#allocation9], 16
    $region69: #{tpu_custom_call.1} parent=1 // pred_fallthru
      _
    // Predicated region
    $region70: #{tpu_custom_call.1} parent=1 // pred_check
      _
    $region71: #{tpu_custom_call.1} parent=1 // pred_check_branch
      %128 = sbr.rel (0) target = $region73
    $region72: #{tpu_custom_call.1} parent=1 // pred_region
      %129 = dma.done [#allocation12], 256
    $region73: #{tpu_custom_call.1} parent=1 // pred_fallthru
      _
    // Predicated region
    $region74: #{tpu_custom_call.1} parent=1 // pred_check
      _
    $region75: #{tpu_custom_call.1} parent=1 // pred_check_branch
      %131 = sbr.rel (0) target = $region77
    $region76: #{tpu_custom_call.1} parent=1 // pred_region
      %132 = dma.done [#allocation12], 384
    $region77: #{tpu_custom_call.1} parent=1 // pred_fallthru
      _
    %v134 = vld [vmem:[#allocation2] sm:$0x3]
    %v135 = vld [vmem:[#allocation2 + $0x2] sm:$0x3]
    %v136 = vld [vmem:[#allocation2 + $0x4] sm:$0x3]
    %v137 = vld [vmem:[#allocation2 + $0x6] sm:$0x3]
    %v138 = vld [vmem:[#allocation2 + $0x8] sm:$0x3]
    %v139 = vld [vmem:[#allocation2 + $0xa] sm:$0x3]
    %v140 = vld [vmem:[#allocation2 + $0xc] sm:$0x3]
    %v141 = vld [vmem:[#allocation2 + $0xe] sm:$0x3]
    %v142 = vunpack.c.l.bf16 %v134
    %v143 = vunpack.c.l.bf16 %v135
    %v144 = vunpack.c.l.bf16 %v136
    %v145 = vunpack.c.l.bf16 %v137
    %v146 = vunpack.c.l.bf16 %v138
    %v147 = vunpack.c.l.bf16 %v139
    %v148 = vunpack.c.l.bf16 %v140
    %v149 = vunpack.c.l.bf16 %v141
    %v150 = vld [vmem:[%s1] sm:$0xf]
    %v151 = vunpack.c.l.bf16 %v150
    %vm152 = vcmask 31744
    %v153 = vsel %vm152, %v151, 0.0
    %154 = vadd.xlane.f32.xlu0 %v153
    %v155 = vpop.xlane.xlu0 %154
    %v156 = vmax.f32 %v155, 1.0
    %v157 = vrcp.pop %v156
    %v158 = vmul.f32 %v151, %v157
    %v159 = vlaneseq
    %v160 = vshrl.u32 %v159, 7
    %v161 = vsub.s32 0, %v160
    %v162 = vrot.slane %v158, %v161
    %164 = vbcast.lane.b32.xlu0 %v162, 256
    %v165 = vpop.permute.xlu0 %164
    %v166 = vlaneseq
    %v167 = vshrl.u32 %v166, 7
    %v168 = vsub.s32 1, %v167
    %v169 = vrot.slane %v158, %v168
    %171 = vbcast.lane.b32.xlu0 %v169, 256
    %v172 = vpop.permute.xlu0 %171
    %v173 = vlaneseq
    %v174 = vshrl.u32 %v173, 7
    %v175 = vsub.s32 2, %v174
    %v176 = vrot.slane %v158, %v175
    %178 = vbcast.lane.b32.xlu0 %v176, 256
    %v179 = vpop.permute.xlu0 %178
    %v180 = vlaneseq
    %v181 = vshrl.u32 %v180, 7
    %v182 = vsub.s32 3, %v181
    %v183 = vrot.slane %v158, %v182
    %185 = vbcast.lane.b32.xlu0 %v183, 256
    %v186 = vpop.permute.xlu0 %185
    %v187 = vlaneseq
    %v188 = vshrl.u32 %v187, 7
    %v189 = vsub.s32 4, %v188
    %v190 = vrot.slane %v158, %v189
    %192 = vbcast.lane.b32.xlu0 %v190, 256
    %v193 = vpop.permute.xlu0 %192
    %v194 = vlaneseq
    %v195 = vshrl.u32 %v194, 7
    %v196 = vsub.s32 5, %v195
    %v197 = vrot.slane %v158, %v196
    %199 = vbcast.lane.b32.xlu0 %v197, 256
    %v200 = vpop.permute.xlu0 %199
    %v201 = vlaneseq
    %v202 = vshrl.u32 %v201, 7
    %v203 = vsub.s32 6, %v202
    %v204 = vrot.slane %v158, %v203
    %206 = vbcast.lane.b32.xlu0 %v204, 256
    %v207 = vpop.permute.xlu0 %206
    %v208 = vlaneseq
    %v209 = vshrl.u32 %v208, 7
    %v210 = vsub.s32 7, %v209
    %v211 = vrot.slane %v158, %v210
    %213 = vbcast.lane.b32.xlu0 %v211, 256
    %v214 = vpop.permute.xlu0 %213
    %v215 = vmul.f32 %v142, %v165
    %v216 = vmul.f32 %v143, %v172
    %v217 = vmul.f32 %v144, %v179
    %v218 = vmul.f32 %v145, %v186
    %v219 = vmul.f32 %v146, %v193
    %v220 = vmul.f32 %v147, %v200
    %v221 = vmul.f32 %v148, %v207
    %v222 = vmul.f32 %v149, %v214
    %vm223 = vcmask 257024
    %v224 = vsel %vm223, %v215, 0.0
    %v225 = vrot.slane %v224, 4
    %v226 = vadd.f32 %v224, %v225
    %v227 = vrot.slane %v226, 2
    %v228 = vadd.f32 %v226, %v227
    %v229 = vrot.slane %v228, 1
    %v230 = vadd.f32 %v228, %v229
    %v231 = vsel %vm223, %v216, 0.0
    %v232 = vrot.slane %v231, 4
    %v233 = vadd.f32 %v231, %v232
    %v234 = vrot.slane %v233, 2
    %v235 = vadd.f32 %v233, %v234
    %v236 = vrot.slane %v235, 1
    %v237 = vadd.f32 %v235, %v236
    %v238 = vsel %vm223, %v217, 0.0
    %v239 = vrot.slane %v238, 4
    %v240 = vadd.f32 %v238, %v239
    %v241 = vrot.slane %v240, 2
    %v242 = vadd.f32 %v240, %v241
    %v243 = vrot.slane %v242, 1
    %v244 = vadd.f32 %v242, %v243
    %v245 = vsel %vm223, %v218, 0.0
    %v246 = vrot.slane %v245, 4
    %v247 = vadd.f32 %v245, %v246
    %v248 = vrot.slane %v247, 2
    %v249 = vadd.f32 %v247, %v248
    %v250 = vrot.slane %v249, 1
    %v251 = vadd.f32 %v249, %v250
    %v252 = vsel %vm223, %v219, 0.0
    %v253 = vrot.slane %v252, 4
    %v254 = vadd.f32 %v252, %v253
    %v255 = vrot.slane %v254, 2
    %v256 = vadd.f32 %v254, %v255
    %v257 = vrot.slane %v256, 1
    %v258 = vadd.f32 %v256, %v257
    %v259 = vsel %vm223, %v220, 0.0
    %v260 = vrot.slane %v259, 4
    %v261 = vadd.f32 %v259, %v260
    %v262 = vrot.slane %v261, 2
    %v263 = vadd.f32 %v261, %v262
    %v264 = vrot.slane %v263, 1
    %v265 = vadd.f32 %v263, %v264
    %v266 = vsel %vm223, %v221, 0.0
    %v267 = vrot.slane %v266, 4
    %v268 = vadd.f32 %v266, %v267
    %v269 = vrot.slane %v268, 2
    %v270 = vadd.f32 %v268, %v269
    %v271 = vrot.slane %v270, 1
    %v272 = vadd.f32 %v270, %v271
    %v273 = vsel %vm223, %v222, 0.0
    %v274 = vrot.slane %v273, 4
    %v275 = vadd.f32 %v273, %v274
    %v276 = vrot.slane %v275, 2
    %v277 = vadd.f32 %v275, %v276
    %v278 = vrot.slane %v277, 1
    %v279 = vadd.f32 %v277, %v278
    %v280 = vld [vmem:[%s2] sm:$0xf]
    %v281 = vld [vmem:[%s2 + $0x4] sm:$0xf]
    %v282 = vld [vmem:[%s2 + $0x8] sm:$0xf]
    %v283 = vld [vmem:[%s2 + $0xc] sm:$0xf]
    %v284 = vld [vmem:[%s2 + $0x10] sm:$0xf]
    %v285 = vld [vmem:[%s2 + $0x14] sm:$0xf]
    %v286 = vld [vmem:[%s2 + $0x18] sm:$0xf]
    %v287 = vld [vmem:[%s2 + $0x1c] sm:$0xf]
    %v288 = vunpack.c.l.bf16 %v280
    %v289 = vunpack.c.l.bf16 %v281
    %v290 = vunpack.c.l.bf16 %v282
    %v291 = vunpack.c.l.bf16 %v283
    %v292 = vunpack.c.l.bf16 %v284
    %v293 = vunpack.c.l.bf16 %v285
    %v294 = vunpack.c.l.bf16 %v286
    %v295 = vunpack.c.l.bf16 %v287
    %v296 = vld [vmem:[#allocation5] sm:$0xf]
    %v297 = vunpack.c.l.bf16 %v296
    %vm298 = vcmask 64512
    %v299 = vsel %vm298, %v297, 0.0
    %300 = vadd.xlane.f32.xlu0 %v299
    %v301 = vpop.xlane.xlu0 %300
    %v302 = vmax.f32 %v301, 1.0
    %v303 = vrcp.pop %v302
    %v304 = vmul.f32 %v297, %v303
    %v305 = vlaneseq
    %v306 = vshrl.u32 %v305, 7
    %v307 = vsub.s32 0, %v306
    %v308 = vrot.slane %v304, %v307
    %310 = vbcast.lane.b32.xlu0 %v308, 256
    %v311 = vpop.permute.xlu0 %310
    %v312 = vlaneseq
    %v313 = vshrl.u32 %v312, 7
    %v314 = vsub.s32 1, %v313
    %v315 = vrot.slane %v304, %v314
    %317 = vbcast.lane.b32.xlu0 %v315, 256
    %v318 = vpop.permute.xlu0 %317
    %v319 = vlaneseq
    %v320 = vshrl.u32 %v319, 7
    %v321 = vsub.s32 2, %v320
    %v322 = vrot.slane %v304, %v321
    %324 = vbcast.lane.b32.xlu0 %v322, 256
    %v325 = vpop.permute.xlu0 %324
    %v326 = vlaneseq
    %v327 = vshrl.u32 %v326, 7
    %v328 = vsub.s32 3, %v327
    %v329 = vrot.slane %v304, %v328
    %331 = vbcast.lane.b32.xlu0 %v329, 256
    %v332 = vpop.permute.xlu0 %331
    %v333 = vlaneseq
    %v334 = vshrl.u32 %v333, 7
    %v335 = vsub.s32 4, %v334
    %v336 = vrot.slane %v304, %v335
    %338 = vbcast.lane.b32.xlu0 %v336, 256
    %v339 = vpop.permute.xlu0 %338
    %v340 = vlaneseq
    %v341 = vshrl.u32 %v340, 7
    %v342 = vsub.s32 5, %v341
    %v343 = vrot.slane %v304, %v342
    %345 = vbcast.lane.b32.xlu0 %v343, 256
    %v346 = vpop.permute.xlu0 %345
    %v347 = vlaneseq
    %v348 = vshrl.u32 %v347, 7
    %v349 = vsub.s32 6, %v348
    %v350 = vrot.slane %v304, %v349
    %352 = vbcast.lane.b32.xlu0 %v350, 256
    %v353 = vpop.permute.xlu0 %352
    %v354 = vlaneseq
    %v355 = vshrl.u32 %v354, 7
    %v356 = vsub.s32 7, %v355
    %v357 = vrot.slane %v304, %v356
    %359 = vbcast.lane.b32.xlu0 %v357, 256
    %v360 = vpop.permute.xlu0 %359
    %v361 = vmul.f32 %v288, %v311
    %v362 = vmul.f32 %v289, %v318
    %v363 = vmul.f32 %v290, %v325
    %v364 = vmul.f32 %v291, %v332
    %v365 = vmul.f32 %v292, %v339
    %v366 = vmul.f32 %v293, %v346
    %v367 = vmul.f32 %v294, %v353
    %v368 = vmul.f32 %v295, %v360
    %vm369 = vcmask 261120
    %v370 = vsel %vm369, %v361, 0.0
    %v371 = vrot.slane %v370, 4
    %v372 = vadd.f32 %v370, %v371
    %v373 = vrot.slane %v372, 2
    %v374 = vadd.f32 %v372, %v373
    %v375 = vrot.slane %v374, 1
    %v376 = vadd.f32 %v374, %v375
    %v377 = vsel %vm369, %v362, 0.0
    %v378 = vrot.slane %v377, 4
    %v379 = vadd.f32 %v377, %v378
    %v380 = vrot.slane %v379, 2
    %v381 = vadd.f32 %v379, %v380
    %v382 = vrot.slane %v381, 1
    %v383 = vadd.f32 %v381, %v382
    %v384 = vsel %vm369, %v363, 0.0
    %v385 = vrot.slane %v384, 4
    %v386 = vadd.f32 %v384, %v385
    %v387 = vrot.slane %v386, 2
    %v388 = vadd.f32 %v386, %v387
    %v389 = vrot.slane %v388, 1
    %v390 = vadd.f32 %v388, %v389
    %v391 = vsel %vm369, %v364, 0.0
    %v392 = vrot.slane %v391, 4
    %v393 = vadd.f32 %v391, %v392
    %v394 = vrot.slane %v393, 2
    %v395 = vadd.f32 %v393, %v394
    %v396 = vrot.slane %v395, 1
    %v397 = vadd.f32 %v395, %v396
    %v398 = vsel %vm369, %v365, 0.0
    %v399 = vrot.slane %v398, 4
    %v400 = vadd.f32 %v398, %v399
    %v401 = vrot.slane %v400, 2
    %v402 = vadd.f32 %v400, %v401
    %v403 = vrot.slane %v402, 1
    %v404 = vadd.f32 %v402, %v403
    %v405 = vsel %vm369, %v366, 0.0
    %v406 = vrot.slane %v405, 4
    %v407 = vadd.f32 %v405, %v406
    %v408 = vrot.slane %v407, 2
    %v409 = vadd.f32 %v407, %v408
    %v410 = vrot.slane %v409, 1
    %v411 = vadd.f32 %v409, %v410
    %v412 = vsel %vm369, %v367, 0.0
    %v413 = vrot.slane %v412, 4
    %v414 = vadd.f32 %v412, %v413
    %v415 = vrot.slane %v414, 2
    %v416 = vadd.f32 %v414, %v415
    %v417 = vrot.slane %v416, 1
    %v418 = vadd.f32 %v416, %v417
    %v419 = vsel %vm369, %v368, 0.0
    %v420 = vrot.slane %v419, 4
    %v421 = vadd.f32 %v419, %v420
    %v422 = vrot.slane %v421, 2
    %v423 = vadd.f32 %v421, %v422
    %v424 = vrot.slane %v423, 1
    %v425 = vadd.f32 %v423, %v424
    %v426 = vpack.c.bf16 %v230, %v230
    %v427 = vpack.c.bf16 %v237, %v237
    %v428 = vpack.c.bf16 %v244, %v244
    %v429 = vpack.c.bf16 %v251, %v251
    %v430 = vpack.c.bf16 %v258, %v258
    %v431 = vpack.c.bf16 %v265, %v265
    %v432 = vpack.c.bf16 %v272, %v272
    %v433 = vpack.c.bf16 %v279, %v279
    %v434 = vld [vmem:[#allocation7] sm:$0xf]
    %v435 = vld [vmem:[#allocation7 + $0x4] sm:$0xf]
    %v436 = vld [vmem:[#allocation7 + $0x8] sm:$0xf]
    %v437 = vld [vmem:[#allocation7 + $0xc] sm:$0xf]
    %v438 = vpack.c.bf16 %v376, %v376
    %v439 = vpack.c.bf16 %v383, %v383
    %v440 = vpack.c.bf16 %v390, %v390
    %v441 = vpack.c.bf16 %v397, %v397
    %v442 = vpack.c.bf16 %v404, %v404
    %v443 = vpack.c.bf16 %v411, %v411
    %v444 = vpack.c.bf16 %v418, %v418
    %v445 = vpack.c.bf16 %v425, %v425
    %v446 = vld [vmem:[#allocation8] sm:$0xf]
    %v447 = vld [vmem:[#allocation8 + $0x4] sm:$0xf]
    %v448 = vld [vmem:[#allocation8 + $0x8] sm:$0xf]
    %v449 = vld [vmem:[#allocation8 + $0xc] sm:$0xf]
    %v458 = vunpack.c.l.b16 %v438
    %v459 = vunpack.c.l.b16 %v439
    %v460 = vunpack.c.l.b16 %v440
    %v461 = vunpack.c.l.b16 %v441
    %v462 = vunpack.c.l.b16 %v442
    %v463 = vunpack.c.l.b16 %v443
    %v464 = vunpack.c.l.b16 %v444
    %v465 = vunpack.c.l.b16 %v445
    %vm466 = vcmask 1041409
    %v467 = vsel %vm466, %v459, %v458
    %vm468 = vcmask 1042434
    %v469 = vsel %vm468, %v460, %v467
    %vm470 = vcmask 1043459
    %v471 = vsel %vm470, %v461, %v469
    %vm472 = vcmask 1044484
    %v473 = vsel %vm472, %v462, %v471
    %vm474 = vcmask 1045509
    %v475 = vsel %vm474, %v463, %v473
    %vm476 = vcmask 1046534
    %v477 = vsel %vm476, %v464, %v475
    %vm478 = vcmask 1047559
    %v479 = vsel %vm478, %v465, %v477
    %v480 = vpack.c.b16 %v479, %v479
    %v485 = vunpack.c.l.b16 %v446
    %v486 = vunpack.c.l.b16 %v447
    %v487 = vunpack.c.l.b16 %v448
    %v488 = vunpack.c.l.b16 %v449
    %v489 = vpack.c.b16 %v486, %v485
    %v490 = vpack.c.b16 %v488, %v487
    %v494 = vsel %vm369, %v480, 0
    %496 = vmatprep.subr.bf16.mxu0 0
    %497 = vmatpush1.bf16.msra.mxu0 0
    %498 = vmatprep.subr.bf16.mxu0 0
    %499 = vmatpush1.bf16.msra.mxu0 0
    %500 = vmatprep.subr.bf16.mxu0 0
    %501 = vmatpush1.bf16.msra.mxu0 0
    %502 = vmatprep.subr.bf16.mxu0 0
    %503 = vmatpush1.bf16.msra.mxu0 0
    %504 = vmatprep.subr.bf16.mxu0 0
    %505 = vmatpush1.bf16.msra.mxu0 0
    %506 = vmatprep.subr.bf16.mxu0 0
    %507 = vmatpush1.bf16.msra.mxu0 0
    %508 = vmatprep.subr.bf16.mxu0 0
    %509 = vmatpush1.bf16.msra.mxu0 %v490
    %510 = vmatprep.subr.bf16.mxu0 0
    %511 = vmatpush1.bf16.msra.mxu0 %v489
    %512 = vmatprep.subr.bf16.mxu0 0
    %513 = vmatpush2.bf16.msra.mxu0 0
    %514 = vmatprep.subr.bf16.mxu0 0
    %515 = vmatpush2.bf16.msra.mxu0 0
    %516 = vmatprep.subr.bf16.mxu0 0
    %517 = vmatpush2.bf16.msra.mxu0 0
    %518 = vmatprep.subr.bf16.mxu0 0
    %519 = vmatpush2.bf16.msra.mxu0 0
    %520 = vmatprep.subr.bf16.mxu0 0
    %521 = vmatpush2.bf16.msra.mxu0 0
    %522 = vmatprep.subr.bf16.mxu0 0
    %523 = vmatpush2.bf16.msra.mxu0 0
    %524 = vmatprep.subr.bf16.mxu0 0
    %525 = vmatpush2.bf16.msra.mxu0 0
    %526 = vmatprep.subr.bf16.mxu0 0
    %527 = vmatpush2.bf16.msra.mxu0 0
    %528 = vmatprep.mubr.bf16.mxu0 0
    %529 = vmatmul.mubr.bf16.gmra.mxu0 %v494
    %v530 = vpop.f32.mrf.mxu0
    %v531 = vadd.f32 0.0, %v530
    %v532 = vpop.f32.mrf.mxu0
    %v533 = vpop.f32.mrf.mxu0
    %v534 = vpop.f32.mrf.mxu0
    %535 = vdwg.mxu0
    %v544 = vunpack.c.l.b16 %v426
    %v545 = vunpack.c.l.b16 %v427
    %v546 = vunpack.c.l.b16 %v428
    %v547 = vunpack.c.l.b16 %v429
    %v548 = vunpack.c.l.b16 %v430
    %v549 = vunpack.c.l.b16 %v431
    %v550 = vunpack.c.l.b16 %v432
    %v551 = vunpack.c.l.b16 %v433
    %v552 = vsel %vm466, %v545, %v544
    %v553 = vsel %vm468, %v546, %v552
    %v554 = vsel %vm470, %v547, %v553
    %v555 = vsel %vm472, %v548, %v554
    %v556 = vsel %vm474, %v549, %v555
    %v557 = vsel %vm476, %v550, %v556
    %v558 = vsel %vm478, %v551, %v557
    %v559 = vpack.c.b16 %v558, %v558
    %v564 = vunpack.c.l.b16 %v434
    %v565 = vunpack.c.l.b16 %v435
    %v566 = vunpack.c.l.b16 %v436
    %v567 = vunpack.c.l.b16 %v437
    %v568 = vpack.c.b16 %v565, %v564
    %v569 = vpack.c.b16 %v567, %v566
    %v573 = vsel %vm369, %v559, 0
    %575 = vmatprep.subr.bf16.mxu0 0
    %576 = vmatpush1.bf16.msra.mxu0 0
    %577 = vmatprep.subr.bf16.mxu0 0
    %578 = vmatpush1.bf16.msra.mxu0 0
    %579 = vmatprep.subr.bf16.mxu0 0
    %580 = vmatpush1.bf16.msra.mxu0 0
    %581 = vmatprep.subr.bf16.mxu0 0
    %582 = vmatpush1.bf16.msra.mxu0 0
    %583 = vmatprep.subr.bf16.mxu0 0
    %584 = vmatpush1.bf16.msra.mxu0 0
    %585 = vmatprep.subr.bf16.mxu0 0
    %586 = vmatpush1.bf16.msra.mxu0 0
    %587 = vmatprep.subr.bf16.mxu0 0
    %588 = vmatpush1.bf16.msra.mxu0 %v569
    %589 = vmatprep.subr.bf16.mxu0 0
    %590 = vmatpush1.bf16.msra.mxu0 %v568
    %591 = vmatprep.subr.bf16.mxu0 0
    %592 = vmatpush2.bf16.msra.mxu0 0
    %593 = vmatprep.subr.bf16.mxu0 0
    %594 = vmatpush2.bf16.msra.mxu0 0
    %595 = vmatprep.subr.bf16.mxu0 0
    %596 = vmatpush2.bf16.msra.mxu0 0
    %597 = vmatprep.subr.bf16.mxu0 0
    %598 = vmatpush2.bf16.msra.mxu0 0
    %599 = vmatprep.subr.bf16.mxu0 0
    %600 = vmatpush2.bf16.msra.mxu0 0
    %601 = vmatprep.subr.bf16.mxu0 0
    %602 = vmatpush2.bf16.msra.mxu0 0
    %603 = vmatprep.subr.bf16.mxu0 0
    %604 = vmatpush2.bf16.msra.mxu0 0
    %605 = vmatprep.subr.bf16.mxu0 0
    %606 = vmatpush2.bf16.msra.mxu0 0
    %607 = vmatprep.mubr.bf16.mxu0 0
    %608 = vmatmul.mubr.bf16.gmra.mxu0 %v573
    %v609 = vpop.f32.mrf.mxu0
    %v610 = vadd.f32 %v531, %v609
    %v611 = vpop.f32.mrf.mxu0
    %v612 = vpop.f32.mrf.mxu0
    %v613 = vpop.f32.mrf.mxu0
    %614 = vdwg.mxu0
    %v615 = vld [vmem:[#allocation10] sm:$0x1]
    %v617 = vlaneseq
    %v618 = vshrl.u32 %v617, 7
    %v619 = vsub.s32 0, %v618
    %v620 = vrot.slane %v615, %v619
    %v622 = vadd.f32 %v610, %v620
    %v623 = vtanh.pop %v622
    %v624 = vpack.c.bf16 %v623, %v623
    %v625 = vld [vmem:[#allocation11] sm:$0xf]
    %v626 = vld [vmem:[#allocation11 + $0x4] sm:$0xf]
    %v627 = vld [vmem:[#allocation11 + $0x8] sm:$0xf]
    %v628 = vld [vmem:[#allocation11 + $0xc] sm:$0xf]
    %v629 = vld [vmem:[%s9] sm:$0x1]
    %v631 = vlaneseq
    %v632 = vshrl.u32 %v631, 7
    %v633 = vsub.s32 0, %v632
    %v634 = vrot.slane %v629, %v633
    %v640 = vunpack.c.l.b16 %v625
    %v641 = vunpack.c.l.b16 %v626
    %v642 = vunpack.c.l.b16 %v627
    %v643 = vunpack.c.l.b16 %v628
    %v644 = vpack.c.b16 %v641, %v640
    %v645 = vpack.c.b16 %v643, %v642
    %v649 = vsel %vm369, %v624, 0
    %651 = vmatprep.subr.bf16.mxu0 0
    %652 = vmatpush1.bf16.msra.mxu0 0
    %653 = vmatprep.subr.bf16.mxu0 0
    %654 = vmatpush1.bf16.msra.mxu0 0
    %655 = vmatprep.subr.bf16.mxu0 0
    %656 = vmatpush1.bf16.msra.mxu0 0
    %657 = vmatprep.subr.bf16.mxu0 0
    %658 = vmatpush1.bf16.msra.mxu0 0
    %659 = vmatprep.subr.bf16.mxu0 0
    %660 = vmatpush1.bf16.msra.mxu0 0
    %661 = vmatprep.subr.bf16.mxu0 0
    %662 = vmatpush1.bf16.msra.mxu0 0
    %663 = vmatprep.subr.bf16.mxu0 0
    %664 = vmatpush1.bf16.msra.mxu0 %v645
    %665 = vmatprep.subr.bf16.mxu0 0
    %666 = vmatpush1.bf16.msra.mxu0 %v644
    %667 = vmatprep.subr.bf16.mxu0 0
    %668 = vmatpush2.bf16.msra.mxu0 0
    %669 = vmatprep.subr.bf16.mxu0 0
    %670 = vmatpush2.bf16.msra.mxu0 0
    %671 = vmatprep.subr.bf16.mxu0 0
    %672 = vmatpush2.bf16.msra.mxu0 0
    %673 = vmatprep.subr.bf16.mxu0 0
    %674 = vmatpush2.bf16.msra.mxu0 0
    %675 = vmatprep.subr.bf16.mxu0 0
    %676 = vmatpush2.bf16.msra.mxu0 0
    %677 = vmatprep.subr.bf16.mxu0 0
    %678 = vmatpush2.bf16.msra.mxu0 0
    %679 = vmatprep.subr.bf16.mxu0 0
    %680 = vmatpush2.bf16.msra.mxu0 0
    %681 = vmatprep.subr.bf16.mxu0 0
    %682 = vmatpush2.bf16.msra.mxu0 0
    %683 = vmatprep.mubr.bf16.mxu0 0
    %684 = vmatmul.mubr.bf16.gmra.mxu0 %v649
    %v685 = vpop.f32.mrf.mxu0
    %v686 = vadd.f32 %v634, %v685
    %v687 = vpop.f32.mrf.mxu0
    %v688 = vpop.f32.mrf.mxu0
    %v689 = vpop.f32.mrf.mxu0
    %690 = vdwg.mxu0
    %v691 = vld [vmem:[%s11] sm:$0x1]
    %v693 = vlaneseq
    %v694 = vshrl.u32 %v693, 7
    %v695 = vsub.s32 0, %v694
    %v696 = vrot.slane %v691, %v695
    %v698 = vpack.c.bf16 0.0, 0.0
    %v699 = vld [vmem:[#allocation13] sm:$0xf]
    %v700 = vld [vmem:[#allocation13 + $0x4] sm:$0xf]
    %v701 = vld [vmem:[#allocation13 + $0x8] sm:$0xf]
    %v702 = vld [vmem:[#allocation13 + $0xc] sm:$0xf]
    %v703 = vld [vmem:[#allocation13 + $0x10] sm:$0xf]
    %v704 = vld [vmem:[#allocation13 + $0x14] sm:$0xf]
    %v711 = vunpack.c.l.b16 %v699
    %v712 = vunpack.c.l.b16 %v700
    %v713 = vunpack.c.l.b16 %v701
    %v714 = vunpack.c.l.b16 %v702
    %v715 = vunpack.c.l.b16 %v703
    %v716 = vunpack.c.l.b16 %v704
    %v717 = vpack.c.b16 %v712, %v711
    %v718 = vpack.c.b16 %v714, %v713
    %v719 = vpack.c.b16 %v716, %v715
    %vm723 = vcmask 392192
    %v725 = vsel %vm723, %v698, 0
    %727 = vmatprep.subr.bf16.mxu0 0
    %728 = vmatpush1.bf16.msra.mxu0 0
    %729 = vmatprep.subr.bf16.mxu0 0
    %730 = vmatpush1.bf16.msra.mxu0 0
    %731 = vmatprep.subr.bf16.mxu0 0
    %732 = vmatpush1.bf16.msra.mxu0 0
    %733 = vmatprep.subr.bf16.mxu0 0
    %734 = vmatpush1.bf16.msra.mxu0 0
    %735 = vmatprep.subr.bf16.mxu0 0
    %736 = vmatpush1.bf16.msra.mxu0 0
    %737 = vmatprep.subr.bf16.mxu0 0
    %738 = vmatpush1.bf16.msra.mxu0 %v719
    %739 = vmatprep.subr.bf16.mxu0 0
    %740 = vmatpush1.bf16.msra.mxu0 %v718
    %741 = vmatprep.subr.bf16.mxu0 0
    %742 = vmatpush1.bf16.msra.mxu0 %v717
    %743 = vmatprep.subr.bf16.mxu0 0
    %744 = vmatpush2.bf16.msra.mxu0 0
    %745 = vmatprep.subr.bf16.mxu0 0
    %746 = vmatpush2.bf16.msra.mxu0 0
    %747 = vmatprep.subr.bf16.mxu0 0
    %748 = vmatpush2.bf16.msra.mxu0 0
    %749 = vmatprep.subr.bf16.mxu0 0
    %750 = vmatpush2.bf16.msra.mxu0 0
    %751 = vmatprep.subr.bf16.mxu0 0
    %752 = vmatpush2.bf16.msra.mxu0 0
    %753 = vmatprep.subr.bf16.mxu0 0
    %754 = vmatpush2.bf16.msra.mxu0 0
    %755 = vmatprep.subr.bf16.mxu0 0
    %756 = vmatpush2.bf16.msra.mxu0 0
    %757 = vmatprep.subr.bf16.mxu0 0
    %758 = vmatpush2.bf16.msra.mxu0 0
    %759 = vmatprep.mubr.bf16.mxu0 0
    %760 = vmatmul.mubr.bf16.gmra.mxu0 %v725
    %v761 = vpop.f32.mrf.mxu0
    %v762 = vadd.f32 0.0, %v761
    %v763 = vpop.f32.mrf.mxu0
    %v764 = vpop.f32.mrf.mxu0
    %v765 = vpop.f32.mrf.mxu0
    %766 = vdwg.mxu0
    %v767 = vadd.f32 %v686, %v762
    %v768 = vxor.u32 %v767, 2147483648
    %v769 = vmul.f32 %v768, 1.442695
    %v770 = vpow.pop %v769
    %v771 = vadd.f32 %v770, 1.0
    %v772 = vrcp.pop %v771
    %v773 = vmul.f32 1.0, %v772
    %v774 = vtanh.pop %v767
    %v775 = vmul.f32 %v773, 0.0
    %777 = vrot.lane.b32.xlu0 %v774, 32
    %v778 = vpop.permute.xlu0 %777
    %v780 = vmul.f32 %v773, %v778
    %782 = vrot.lane.b32.xlu0 %v780, 32
    %v783 = vpop.permute.xlu0 %782
    %v785 = vadd.f32 %v775, %v783
    %v786 = vtanh.pop %v785
    %788 = vrot.lane.b32.xlu0 %v786, 32
    %v789 = vpop.permute.xlu0 %788
    %v791 = vmul.f32 %v773, %v789
    %v792 = vpack.c.bf16 %v791, %v791
    %v793 = vld [vmem:[%s10] sm:$0xf]
    %v794 = vld [vmem:[%s10 + $0x4] sm:$0xf]
    %v795 = vld [vmem:[%s10 + $0x8] sm:$0xf]
    %v796 = vld [vmem:[%s10 + $0xc] sm:$0xf]
    %798 = vrot.lane.b32.xlu0 %v792, 64
    %v799 = vpop.permute.xlu0 %798
    %v804 = vunpack.c.l.b16 %v793
    %v805 = vunpack.c.l.b16 %v794
    %v806 = vunpack.c.l.b16 %v795
    %v807 = vunpack.c.l.b16 %v796
    %v808 = vpack.c.b16 %v805, %v804
    %v809 = vpack.c.b16 %v807, %v806
    %v813 = vsel %vm369, %v799, 0
    %815 = vmatprep.subr.bf16.mxu0 0
    %816 = vmatpush1.bf16.msra.mxu0 0
    %817 = vmatprep.subr.bf16.mxu0 0
    %818 = vmatpush1.bf16.msra.mxu0 0
    %819 = vmatprep.subr.bf16.mxu0 0
    %820 = vmatpush1.bf16.msra.mxu0 0
    %821 = vmatprep.subr.bf16.mxu0 0
    %822 = vmatpush1.bf16.msra.mxu0 0
    %823 = vmatprep.subr.bf16.mxu0 0
    %824 = vmatpush1.bf16.msra.mxu0 0
    %825 = vmatprep.subr.bf16.mxu0 0
    %826 = vmatpush1.bf16.msra.mxu0 0
    %827 = vmatprep.subr.bf16.mxu0 0
    %828 = vmatpush1.bf16.msra.mxu0 %v809
    %829 = vmatprep.subr.bf16.mxu0 0
    %830 = vmatpush1.bf16.msra.mxu0 %v808
    %831 = vmatprep.subr.bf16.mxu0 0
    %832 = vmatpush2.bf16.msra.mxu0 0
    %833 = vmatprep.subr.bf16.mxu0 0
    %834 = vmatpush2.bf16.msra.mxu0 0
    %835 = vmatprep.subr.bf16.mxu0 0
    %836 = vmatpush2.bf16.msra.mxu0 0
    %837 = vmatprep.subr.bf16.mxu0 0
    %838 = vmatpush2.bf16.msra.mxu0 0
    %839 = vmatprep.subr.bf16.mxu0 0
    %840 = vmatpush2.bf16.msra.mxu0 0
    %841 = vmatprep.subr.bf16.mxu0 0
    %842 = vmatpush2.bf16.msra.mxu0 0
    %843 = vmatprep.subr.bf16.mxu0 0
    %844 = vmatpush2.bf16.msra.mxu0 0
    %845 = vmatprep.subr.bf16.mxu0 0
    %846 = vmatpush2.bf16.msra.mxu0 0
    %847 = vmatprep.mubr.bf16.mxu0 0
    %848 = vmatmul.mubr.bf16.gmra.mxu0 %v813
    %v849 = vpop.f32.mrf.mxu0
    %v850 = vadd.f32 %v696, %v849
    %v851 = vpop.f32.mrf.mxu0
    %v852 = vpop.f32.mrf.mxu0
    %v853 = vpop.f32.mrf.mxu0
    %854 = vdwg.mxu0
    %vm855 = vcmask 130048
    %v856 = vsel %vm855, %v850, -inf
    %857 = vmax.xlane.f32.xlu0 %v856
    %v858 = vpop.xlane.xlu0 %857
    %v859 = vsub.f32 %v850, %v858
    %v860 = vmul.f32 %v859, 1.442695
    %v861 = vpow.pop %v860
    %v862 = vsel %vm855, %v861, 0.0
    %863 = vadd.xlane.f32.xlu0 %v862
    %v864 = vpop.xlane.xlu0 %863
    %v865 = vrcp.pop %v864
    %v866 = vmul.f32 %v861, %v865
    %868 = vrot.lane.b32.xlu0 %v791, 80
    %v869 = vpop.permute.xlu0 %868
    %v871 = vsel %vm855, %v866, %v869
    %v872 = vpack.c.bf16 %v871, %v871
    %v874 = vsel %vm723, %v872, 0
    %876 = vmatprep.subr.bf16.mxu0 0
    %877 = vmatpush1.bf16.msra.mxu0 0
    %878 = vmatprep.subr.bf16.mxu0 0
    %879 = vmatpush1.bf16.msra.mxu0 0
    %880 = vmatprep.subr.bf16.mxu0 0
    %881 = vmatpush1.bf16.msra.mxu0 0
    %882 = vmatprep.subr.bf16.mxu0 0
    %883 = vmatpush1.bf16.msra.mxu0 0
    %884 = vmatprep.subr.bf16.mxu0 0
    %885 = vmatpush1.bf16.msra.mxu0 0
    %886 = vmatprep.subr.bf16.mxu0 0
    %887 = vmatpush1.bf16.msra.mxu0 %v719
    %888 = vmatprep.subr.bf16.mxu0 0
    %889 = vmatpush1.bf16.msra.mxu0 %v718
    %890 = vmatprep.subr.bf16.mxu0 0
    %891 = vmatpush1.bf16.msra.mxu0 %v717
    %892 = vmatprep.subr.bf16.mxu0 0
    %893 = vmatpush2.bf16.msra.mxu0 0
    %894 = vmatprep.subr.bf16.mxu0 0
    %895 = vmatpush2.bf16.msra.mxu0 0
    %896 = vmatprep.subr.bf16.mxu0 0
    %897 = vmatpush2.bf16.msra.mxu0 0
    %898 = vmatprep.subr.bf16.mxu0 0
    %899 = vmatpush2.bf16.msra.mxu0 0
    %900 = vmatprep.subr.bf16.mxu0 0
    %901 = vmatpush2.bf16.msra.mxu0 0
    %902 = vmatprep.subr.bf16.mxu0 0
    %903 = vmatpush2.bf16.msra.mxu0 0
    %904 = vmatprep.subr.bf16.mxu0 0
    %905 = vmatpush2.bf16.msra.mxu0 0
    %906 = vmatprep.subr.bf16.mxu0 0
    %907 = vmatpush2.bf16.msra.mxu0 0
    %908 = vmatprep.mubr.bf16.mxu0 0
    %909 = vmatmul.mubr.bf16.gmra.mxu0 %v874
    %v910 = vpop.f32.mrf.mxu0
    %v911 = vadd.f32 0.0, %v910
    %v912 = vpop.f32.mrf.mxu0
    %v913 = vpop.f32.mrf.mxu0
    %v914 = vpop.f32.mrf.mxu0
    %915 = vdwg.mxu0
    %v916 = vadd.f32 %v686, %v911
    %v917 = vxor.u32 %v916, 2147483648
    %v918 = vmul.f32 %v917, 1.442695
    %v919 = vpow.pop %v918
    %v920 = vadd.f32 %v919, 1.0
    %v921 = vrcp.pop %v920
    %v922 = vmul.f32 1.0, %v921
    %v923 = vtanh.pop %v916
    %v924 = vmul.f32 %v922, %v785
    %926 = vrot.lane.b32.xlu0 %v923, 32
    %v927 = vpop.permute.xlu0 %926
    %v929 = vmul.f32 %v922, %v927
    %931 = vrot.lane.b32.xlu0 %v929, 32
    %v932 = vpop.permute.xlu0 %931
    %v934 = vadd.f32 %v924, %v932
    %v935 = vtanh.pop %v934
    %937 = vrot.lane.b32.xlu0 %v935, 32
    %v938 = vpop.permute.xlu0 %937
    %v940 = vmul.f32 %v922, %v938
    %v941 = vpack.c.bf16 %v940, %v940
    %943 = vrot.lane.b32.xlu0 %v941, 64
    %v944 = vpop.permute.xlu0 %943
    %v946 = vsel %vm369, %v944, 0
    %948 = vmatprep.subr.bf16.mxu0 0
    %949 = vmatpush1.bf16.msra.mxu0 0
    %950 = vmatprep.subr.bf16.mxu0 0
    %951 = vmatpush1.bf16.msra.mxu0 0
    %952 = vmatprep.subr.bf16.mxu0 0
    %953 = vmatpush1.bf16.msra.mxu0 0
    %954 = vmatprep.subr.bf16.mxu0 0
    %955 = vmatpush1.bf16.msra.mxu0 0
    %956 = vmatprep.subr.bf16.mxu0 0
    %957 = vmatpush1.bf16.msra.mxu0 0
    %958 = vmatprep.subr.bf16.mxu0 0
    %959 = vmatpush1.bf16.msra.mxu0 0
    %960 = vmatprep.subr.bf16.mxu0 0
    %961 = vmatpush1.bf16.msra.mxu0 %v809
    %962 = vmatprep.subr.bf16.mxu0 0
    %963 = vmatpush1.bf16.msra.mxu0 %v808
    %964 = vmatprep.subr.bf16.mxu0 0
    %965 = vmatpush2.bf16.msra.mxu0 0
    %966 = vmatprep.subr.bf16.mxu0 0
    %967 = vmatpush2.bf16.msra.mxu0 0
    %968 = vmatprep.subr.bf16.mxu0 0
    %969 = vmatpush2.bf16.msra.mxu0 0
    %970 = vmatprep.subr.bf16.mxu0 0
    %971 = vmatpush2.bf16.msra.mxu0 0
    %972 = vmatprep.subr.bf16.mxu0 0
    %973 = vmatpush2.bf16.msra.mxu0 0
    %974 = vmatprep.subr.bf16.mxu0 0
    %975 = vmatpush2.bf16.msra.mxu0 0
    %976 = vmatprep.subr.bf16.mxu0 0
    %977 = vmatpush2.bf16.msra.mxu0 0
    %978 = vmatprep.subr.bf16.mxu0 0
    %979 = vmatpush2.bf16.msra.mxu0 0
    %980 = vmatprep.mubr.bf16.mxu0 0
    %981 = vmatmul.mubr.bf16.gmra.mxu0 %v946
    %v982 = vpop.f32.mrf.mxu0
    %v983 = vadd.f32 %v696, %v982
    %v984 = vpop.f32.mrf.mxu0
    %v985 = vpop.f32.mrf.mxu0
    %v986 = vpop.f32.mrf.mxu0
    %987 = vdwg.mxu0
    %v988 = vsel %vm855, %v983, -inf
    %989 = vmax.xlane.f32.xlu0 %v988
    %v990 = vpop.xlane.xlu0 %989
    %v991 = vsub.f32 %v983, %v990
    %v992 = vmul.f32 %v991, 1.442695
    %v993 = vpow.pop %v992
    %v994 = vsel %vm855, %v993, 0.0
    %995 = vadd.xlane.f32.xlu0 %v994
    %v996 = vpop.xlane.xlu0 %995
    %v997 = vrcp.pop %v996
    %v998 = vmul.f32 %v993, %v997
    %1000 = vrot.lane.b32.xlu0 %v940, 80
    %v1001 = vpop.permute.xlu0 %1000
    %v1003 = vsel %vm855, %v998, %v1001
    %v1004 = vpack.c.bf16 %v1003, %v1003
    %v1006 = vsel %vm723, %v1004, 0
    %1008 = vmatprep.subr.bf16.mxu0 0
    %1009 = vmatpush1.bf16.msra.mxu0 0
    %1010 = vmatprep.subr.bf16.mxu0 0
    %1011 = vmatpush1.bf16.msra.mxu0 0
    %1012 = vmatprep.subr.bf16.mxu0 0
    %1013 = vmatpush1.bf16.msra.mxu0 0
    %1014 = vmatprep.subr.bf16.mxu0 0
    %1015 = vmatpush1.bf16.msra.mxu0 0
    %1016 = vmatprep.subr.bf16.mxu0 0
    %1017 = vmatpush1.bf16.msra.mxu0 0
    %1018 = vmatprep.subr.bf16.mxu0 0
    %1019 = vmatpush1.bf16.msra.mxu0 %v719
    %1020 = vmatprep.subr.bf16.mxu0 0
    %1021 = vmatpush1.bf16.msra.mxu0 %v718
    %1022 = vmatprep.subr.bf16.mxu0 0
    %1023 = vmatpush1.bf16.msra.mxu0 %v717
    %1024 = vmatprep.subr.bf16.mxu0 0
    %1025 = vmatpush2.bf16.msra.mxu0 0
    %1026 = vmatprep.subr.bf16.mxu0 0
    %1027 = vmatpush2.bf16.msra.mxu0 0
    %1028 = vmatprep.subr.bf16.mxu0 0
    %1029 = vmatpush2.bf16.msra.mxu0 0
    %1030 = vmatprep.subr.bf16.mxu0 0
    %1031 = vmatpush2.bf16.msra.mxu0 0
    %1032 = vmatprep.subr.bf16.mxu0 0
    %1033 = vmatpush2.bf16.msra.mxu0 0
    %1034 = vmatprep.subr.bf16.mxu0 0
    %1035 = vmatpush2.bf16.msra.mxu0 0
    %1036 = vmatprep.subr.bf16.mxu0 0
    %1037 = vmatpush2.bf16.msra.mxu0 0
    %1038 = vmatprep.subr.bf16.mxu0 0
    %1039 = vmatpush2.bf16.msra.mxu0 0
    %1040 = vmatprep.mubr.bf16.mxu0 0
    %1041 = vmatmul.mubr.bf16.gmra.mxu0 %v1006
    %v1042 = vpop.f32.mrf.mxu0
    %v1043 = vadd.f32 0.0, %v1042
    %v1044 = vpop.f32.mrf.mxu0
    %v1045 = vpop.f32.mrf.mxu0
    %v1046 = vpop.f32.mrf.mxu0
    %1047 = vdwg.mxu0
    %v1048 = vadd.f32 %v686, %v1043
    %v1049 = vxor.u32 %v1048, 2147483648
    %v1050 = vmul.f32 %v1049, 1.442695
    %v1051 = vpow.pop %v1050
    %v1052 = vadd.f32 %v1051, 1.0
    %v1053 = vrcp.pop %v1052
    %v1054 = vmul.f32 1.0, %v1053
    %v1055 = vtanh.pop %v1048
    %v1056 = vmul.f32 %v1054, %v934
    %1058 = vrot.lane.b32.xlu0 %v1055, 32
    %v1059 = vpop.permute.xlu0 %1058
    %v1061 = vmul.f32 %v1054, %v1059
    %1063 = vrot.lane.b32.xlu0 %v1061, 32
    %v1064 = vpop.permute.xlu0 %1063
    %v1066 = vadd.f32 %v1056, %v1064
    %v1067 = vtanh.pop %v1066
    %1069 = vrot.lane.b32.xlu0 %v1067, 32
    %v1070 = vpop.permute.xlu0 %1069
    %v1072 = vmul.f32 %v1054, %v1070
    %v1073 = vpack.c.bf16 %v1072, %v1072
    %1075 = vrot.lane.b32.xlu0 %v1073, 64
    %v1076 = vpop.permute.xlu0 %1075
    %v1078 = vsel %vm369, %v1076, 0
    %1080 = vmatprep.subr.bf16.mxu0 0
    %1081 = vmatpush1.bf16.msra.mxu0 0
    %1082 = vmatprep.subr.bf16.mxu0 0
    %1083 = vmatpush1.bf16.msra.mxu0 0
    %1084 = vmatprep.subr.bf16.mxu0 0
    %1085 = vmatpush1.bf16.msra.mxu0 0
    %1086 = vmatprep.subr.bf16.mxu0 0
    %1087 = vmatpush1.bf16.msra.mxu0 0
    %1088 = vmatprep.subr.bf16.mxu0 0
    %1089 = vmatpush1.bf16.msra.mxu0 0
    %1090 = vmatprep.subr.bf16.mxu0 0
    %1091 = vmatpush1.bf16.msra.mxu0 0
    %1092 = vmatprep.subr.bf16.mxu0 0
    %1093 = vmatpush1.bf16.msra.mxu0 %v809
    %1094 = vmatprep.subr.bf16.mxu0 0
    %1095 = vmatpush1.bf16.msra.mxu0 %v808
    %1096 = vmatprep.subr.bf16.mxu0 0
    %1097 = vmatpush2.bf16.msra.mxu0 0
    %1098 = vmatprep.subr.bf16.mxu0 0
    %1099 = vmatpush2.bf16.msra.mxu0 0
    %1100 = vmatprep.subr.bf16.mxu0 0
    %1101 = vmatpush2.bf16.msra.mxu0 0
    %1102 = vmatprep.subr.bf16.mxu0 0
    %1103 = vmatpush2.bf16.msra.mxu0 0
    %1104 = vmatprep.subr.bf16.mxu0 0
    %1105 = vmatpush2.bf16.msra.mxu0 0
    %1106 = vmatprep.subr.bf16.mxu0 0
    %1107 = vmatpush2.bf16.msra.mxu0 0
    %1108 = vmatprep.subr.bf16.mxu0 0
    %1109 = vmatpush2.bf16.msra.mxu0 0
    %1110 = vmatprep.subr.bf16.mxu0 0
    %1111 = vmatpush2.bf16.msra.mxu0 0
    %1112 = vmatprep.mubr.bf16.mxu0 0
    %1113 = vmatmul.mubr.bf16.gmra.mxu0 %v1078
    %v1114 = vpop.f32.mrf.mxu0
    %v1115 = vadd.f32 %v696, %v1114
    %v1116 = vpop.f32.mrf.mxu0
    %v1117 = vpop.f32.mrf.mxu0
    %v1118 = vpop.f32.mrf.mxu0
    %1119 = vdwg.mxu0
    %v1120 = vsel %vm855, %v1115, -inf
    %1121 = vmax.xlane.f32.xlu0 %v1120
    %v1122 = vpop.xlane.xlu0 %1121
    %v1123 = vsub.f32 %v1115, %v1122
    %v1124 = vmul.f32 %v1123, 1.442695
    %v1125 = vpow.pop %v1124
    %v1126 = vsel %vm855, %v1125, 0.0
    %1127 = vadd.xlane.f32.xlu0 %v1126
    %v1128 = vpop.xlane.xlu0 %1127
    %v1129 = vrcp.pop %v1128
    %v1130 = vmul.f32 %v1125, %v1129
    %1132 = vrot.lane.b32.xlu0 %v1072, 80
    %v1133 = vpop.permute.xlu0 %1132
    %v1135 = vsel %vm855, %v1130, %v1133
    %v1136 = vpack.c.bf16 %v1135, %v1135
    %v1138 = vsel %vm723, %v1136, 0
    %1140 = vmatprep.subr.bf16.mxu0 0
    %1141 = vmatpush1.bf16.msra.mxu0 0
    %1142 = vmatprep.subr.bf16.mxu0 0
    %1143 = vmatpush1.bf16.msra.mxu0 0
    %1144 = vmatprep.subr.bf16.mxu0 0
    %1145 = vmatpush1.bf16.msra.mxu0 0
    %1146 = vmatprep.subr.bf16.mxu0 0
    %1147 = vmatpush1.bf16.msra.mxu0 0
    %1148 = vmatprep.subr.bf16.mxu0 0
    %1149 = vmatpush1.bf16.msra.mxu0 0
    %1150 = vmatprep.subr.bf16.mxu0 0
    %1151 = vmatpush1.bf16.msra.mxu0 %v719
    %1152 = vmatprep.subr.bf16.mxu0 0
    %1153 = vmatpush1.bf16.msra.mxu0 %v718
    %1154 = vmatprep.subr.bf16.mxu0 0
    %1155 = vmatpush1.bf16.msra.mxu0 %v717
    %1156 = vmatprep.subr.bf16.mxu0 0
    %1157 = vmatpush2.bf16.msra.mxu0 0
    %1158 = vmatprep.subr.bf16.mxu0 0
    %1159 = vmatpush2.bf16.msra.mxu0 0
    %1160 = vmatprep.subr.bf16.mxu0 0
    %1161 = vmatpush2.bf16.msra.mxu0 0
    %1162 = vmatprep.subr.bf16.mxu0 0
    %1163 = vmatpush2.bf16.msra.mxu0 0
    %1164 = vmatprep.subr.bf16.mxu0 0
    %1165 = vmatpush2.bf16.msra.mxu0 0
    %1166 = vmatprep.subr.bf16.mxu0 0
    %1167 = vmatpush2.bf16.msra.mxu0 0
    %1168 = vmatprep.subr.bf16.mxu0 0
    %1169 = vmatpush2.bf16.msra.mxu0 0
    %1170 = vmatprep.subr.bf16.mxu0 0
    %1171 = vmatpush2.bf16.msra.mxu0 0
    %1172 = vmatprep.mubr.bf16.mxu0 0
    %1173 = vmatmul.mubr.bf16.gmra.mxu0 %v1138
    %v1174 = vpop.f32.mrf.mxu0
    %v1175 = vadd.f32 0.0, %v1174
    %v1176 = vpop.f32.mrf.mxu0
    %v1177 = vpop.f32.mrf.mxu0
    %v1178 = vpop.f32.mrf.mxu0
    %1179 = vdwg.mxu0
    %v1180 = vadd.f32 %v686, %v1175
    %v1181 = vxor.u32 %v1180, 2147483648
    %v1182 = vmul.f32 %v1181, 1.442695
    %v1183 = vpow.pop %v1182
    %v1184 = vadd.f32 %v1183, 1.0
    %v1185 = vrcp.pop %v1184
    %v1186 = vmul.f32 1.0, %v1185
    %v1187 = vtanh.pop %v1180
    %v1188 = vmul.f32 %v1186, %v1066
    %1190 = vrot.lane.b32.xlu0 %v1187, 32
    %v1191 = vpop.permute.xlu0 %1190
    %v1193 = vmul.f32 %v1186, %v1191
    %1195 = vrot.lane.b32.xlu0 %v1193, 32
    %v1196 = vpop.permute.xlu0 %1195
    %v1198 = vadd.f32 %v1188, %v1196
    %v1199 = vtanh.pop %v1198
    %1201 = vrot.lane.b32.xlu0 %v1199, 32
    %v1202 = vpop.permute.xlu0 %1201
    %v1204 = vmul.f32 %v1186, %v1202
    %v1205 = vpack.c.bf16 %v1204, %v1204
    %1207 = vrot.lane.b32.xlu0 %v1205, 64
    %v1208 = vpop.permute.xlu0 %1207
    %v1210 = vsel %vm369, %v1208, 0
    %1212 = vmatprep.subr.bf16.mxu0 0
    %1213 = vmatpush1.bf16.msra.mxu0 0
    %1214 = vmatprep.subr.bf16.mxu0 0
    %1215 = vmatpush1.bf16.msra.mxu0 0
    %1216 = vmatprep.subr.bf16.mxu0 0
    %1217 = vmatpush1.bf16.msra.mxu0 0
    %1218 = vmatprep.subr.bf16.mxu0 0
    %1219 = vmatpush1.bf16.msra.mxu0 0
    %1220 = vmatprep.subr.bf16.mxu0 0
    %1221 = vmatpush1.bf16.msra.mxu0 0
    %1222 = vmatprep.subr.bf16.mxu0 0
    %1223 = vmatpush1.bf16.msra.mxu0 0
    %1224 = vmatprep.subr.bf16.mxu0 0
    %1225 = vmatpush1.bf16.msra.mxu0 %v809
    %1226 = vmatprep.subr.bf16.mxu0 0
    %1227 = vmatpush1.bf16.msra.mxu0 %v808
    %1228 = vmatprep.subr.bf16.mxu0 0
    %1229 = vmatpush2.bf16.msra.mxu0 0
    %1230 = vmatprep.subr.bf16.mxu0 0
    %1231 = vmatpush2.bf16.msra.mxu0 0
    %1232 = vmatprep.subr.bf16.mxu0 0
    %1233 = vmatpush2.bf16.msra.mxu0 0
    %1234 = vmatprep.subr.bf16.mxu0 0
    %1235 = vmatpush2.bf16.msra.mxu0 0
    %1236 = vmatprep.subr.bf16.mxu0 0
    %1237 = vmatpush2.bf16.msra.mxu0 0
    %1238 = vmatprep.subr.bf16.mxu0 0
    %1239 = vmatpush2.bf16.msra.mxu0 0
    %1240 = vmatprep.subr.bf16.mxu0 0
    %1241 = vmatpush2.bf16.msra.mxu0 0
    %1242 = vmatprep.subr.bf16.mxu0 0
    %1243 = vmatpush2.bf16.msra.mxu0 0
    %1244 = vmatprep.mubr.bf16.mxu0 0
    %1245 = vmatmul.mubr.bf16.gmra.mxu0 %v1210
    %v1246 = vpop.f32.mrf.mxu0
    %v1247 = vadd.f32 %v696, %v1246
    %v1248 = vpop.f32.mrf.mxu0
    %v1249 = vpop.f32.mrf.mxu0
    %v1250 = vpop.f32.mrf.mxu0
    %1251 = vdwg.mxu0
    %v1252 = vsel %vm855, %v1247, -inf
    %1253 = vmax.xlane.f32.xlu0 %v1252
    %v1254 = vpop.xlane.xlu0 %1253
    %v1255 = vsub.f32 %v1247, %v1254
    %v1256 = vmul.f32 %v1255, 1.442695
    %v1257 = vpow.pop %v1256
    %v1258 = vsel %vm855, %v1257, 0.0
    %1259 = vadd.xlane.f32.xlu0 %v1258
    %v1260 = vpop.xlane.xlu0 %1259
    %v1261 = vrcp.pop %v1260
    %v1262 = vmul.f32 %v1257, %v1261
    %1264 = vrot.lane.b32.xlu0 %v998, 16
    %v1265 = vpop.permute.xlu0 %1264
    %1268 = vrot.lane.b32.xlu0 %v1130, 32
    %v1269 = vpop.permute.xlu0 %1268
    %1272 = vrot.lane.b32.xlu0 %v1262, 48
    %v1273 = vpop.permute.xlu0 %1272
    %v1275 = vsel %vm855, %v866, %v1265
    %v1276 = vsel %vm369, %v1275, %v1269
    %v1277 = vsel %vm723, %v1276, %v1273
    %vm1278 = vcmask 523264
    %v1279 = vsel %vm1278, %v1277, 0.0
    %1280 = vst [vmem:[#allocation14] sm:$0xff] %v1279
    // Predicated region
    $region78: #{tpu_custom_call.1} parent=1 // pred_check
      _
    $region79: #{tpu_custom_call.1} parent=1 // pred_check_branch
      %1282 = sbr.rel (0) target = $region81
    $region80: #{tpu_custom_call.1} parent=1 // pred_region
      %s1284 = ssub.s32 128, 128
      %1285 = vsyncadd [#allocation4], %s1284
      %s1287 = sshll.u32 [#allocation14], 4
      %s1288 = int_to_ptr.vmem [resolvable:$true] %s1287
      %1290 = dma.vmem_to_hbm [thread:$0]  %s1288, 128, %s12, [#allocation4]
    $region81: #{tpu_custom_call.1} parent=1 // pred_fallthru
      _
    // Predicated region
    $region82: #{tpu_custom_call.1} parent=1 // pred_check
      _
    $region83: #{tpu_custom_call.1} parent=1 // pred_check_branch
      %1292 = sbr.rel (0) target = $region85
    $region84: #{tpu_custom_call.1} parent=1 // pred_region
      %1293 = dma.done [#allocation4], 128
    $region85: #{tpu_custom_call.1} parent=1 // pred_fallthru
      _
    %1294 = vsyncpa [#allocation3], 1
    %1295 = vsyncpa [#allocation6], 1
    %1296 = vsyncpa [#allocation9], 1
    %1297 = vsyncpa [#allocation12], 1
    %1298 = vsyncpa [#allocation4], 1

</llo_original>
